<compile_context>
chip_gen: v5e
topology: v5e:2x2
jax: 0.10.0
libtpu: 0.0.40
codegen_flags: <defaults>
</compile_context>

<pallas_src>
import functools

import jax
import jax.numpy as jnp
import numpy as np
from jax.experimental import pallas as pl
from jax.experimental.pallas import tpu as pltpu  # noqa: F401  (TPU-specific tuning hooks)


# ----------------------------------------------------------------------------
# Fused Pallas kernel (all LSTM layers + FC, single invocation, no grid)
# ----------------------------------------------------------------------------
def _make_fused_lstm_kernel(T, B, H, num_layers):
    """Kernel signature (all refs are whole-array VMEM blocks):

    kernel(x_ref,                         # (B, T, D_in)
           w_ih0, w_hh0, b0,              # (D_in,4H), (H,4H), (1,4H)   layer 0 (pre-scaled)
           [w_fused, b] * (L-1),          # (2H,4H), (1,4H) per layer   layers >= 1 (pre-scaled)
           w_fc, b_fc,                    # (H, O), (1, O)
           out_ref)                       # (B, O)
    """

    def kernel(*refs):
        x_ref = refs[0]
        out_ref = refs[-1]

        def gate_math(gates, c):
            # Weight/bias columns for i,f,o were pre-scaled by 0.5, so a single
            # full-lane-width tanh implements sigmoid via 0.5*tanh(x/2)+0.5.
            tg = jnp.tanh(gates)                            # (B, 4H): one EUP op per step
            i_g = 0.5 * tg[:, 0 * H:1 * H] + 0.5
            f_g = 0.5 * tg[:, 1 * H:2 * H] + 0.5
            g_g = tg[:, 2 * H:3 * H]
            o_g = 0.5 * tg[:, 3 * H:4 * H] + 0.5
            c_new = f_g * c + i_g * g_g
            h_new = o_g * jnp.tanh(c_new)
            return h_new, c_new

        # ------------------------------------------------------------------
        # Layer 0: batched input projection (ONE matmul for all T steps),
        # then the unrolled recurrence with only h @ W_hh + add per step.
        # ------------------------------------------------------------------
        w_ih0 = refs[1][...]                                # (D_in, 4H)
        w_hh0 = refs[2][...]                                # (H, 4H)
        b0 = refs[3][...]                                   # (1, 4H)

        x = x_ref[...]                                      # (B, T, D_in)
        # (B, T, D) -> (B*T, D): leading-axis indexing + sublane concat (tiny, one-off)
        xrows = jnp.concatenate([x[b] for b in range(B)], axis=0)          # (B*T, D_in)
        gx_all = jnp.dot(xrows, w_ih0, preferred_element_type=jnp.float32) + b0  # (B*T, 4H)

        def gx_step(t):
            # rows {b*T + t} -> (B, 4H); static slices, independent of the recurrence
            return jnp.concatenate(
                [gx_all[b * T + t:b * T + t + 1, :] for b in range(B)], axis=0)

        h = jnp.zeros((B, H), jnp.float32)
        c = jnp.zeros((B, H), jnp.float32)
        outs = []
        for t in range(T):                                  # fully unrolled recurrence
            gates = gx_step(t) + jnp.dot(h, w_hh0, preferred_element_type=jnp.float32)
            h, c = gate_math(gates, c)
            outs.append(h)

        # ------------------------------------------------------------------
        # Layers >= 1: fused [W_ih; W_hh] weight, ONE matmul per step on the
        # [x_t | h_{t-1}] slab.  Per-timestep (not batched) on purpose so the
        # LLO scheduler keeps the cross-layer wavefront overlap.
        # ------------------------------------------------------------------
        pos = 4
        for _ in range(1, num_layers):
            w_f = refs[pos][...]                            # (2H, 4H)
            b_f = refs[pos + 1][...]                        # (1, 4H)
            pos += 2
            h = jnp.zeros((B, H), jnp.float32)
            c = jnp.zeros((B, H), jnp.float32)
            new_outs = []
            for t in range(T):
                xin = jnp.concatenate([outs[t], h], axis=1)  # (B, 2H)
                gates = jnp.dot(xin, w_f, preferred_element_type=jnp.float32) + b_f
                h, c = gate_math(gates, c)
                new_outs.append(h)
            outs = new_outs

        # Final dense head on the last hidden state only.
        w_fc = refs[pos][...]                               # (H, O)
        b_fc = refs[pos + 1][...]                           # (1, O)
        out_ref[...] = jnp.dot(h, w_fc, preferred_element_type=jnp.float32) + b_fc

    return kernel


# ----------------------------------------------------------------------------
# Wrapper
# ----------------------------------------------------------------------------
@functools.partial(jax.jit, static_argnames=("num_layers",))
def lstm_model_forward(x, kparams, num_layers):
    """Forward pass matching the PyTorch module.

    x: (B, T, D_in) float32 (batch_first, exactly as PyTorch sees it).
    kparams: output of prepare_kernel_params().
    Returns (B, output_dim).
    """
    B, T, D_in = x.shape
    H = kparams["layer0"]["w_hh"].shape[0]
    O = kparams["fc"]["w_t"].shape[1]

    inputs = [x,
              kparams["layer0"]["w_ih"],
              kparams["layer0"]["w_hh"],
              kparams["layer0"]["bias"]]
    in_specs = [
        pl.BlockSpec((B, T, D_in), lambda: (0, 0, 0)),
        pl.BlockSpec((D_in, 4 * H), lambda: (0, 0)),
        pl.BlockSpec((H, 4 * H), lambda: (0, 0)),
        pl.BlockSpec((1, 4 * H), lambda: (0, 0)),
    ]
    for layer in range(1, num_layers):
        p = kparams["fused"][layer - 1]
        inputs += [p["w"], p["bias"]]
        in_specs += [
            pl.BlockSpec((2 * H, 4 * H), lambda: (0, 0)),
            pl.BlockSpec((1, 4 * H), lambda: (0, 0)),
        ]
    inputs += [kparams["fc"]["w_t"], kparams["fc"]["b"]]
    in_specs += [
        pl.BlockSpec((H, O), lambda: (0, 0)),
        pl.BlockSpec((1, O), lambda: (0, 0)),
    ]

    kernel = _make_fused_lstm_kernel(T, B, H, num_layers)

    return pl.pallas_call(
        kernel,
        out_shape=jax.ShapeDtypeStruct((B, O), jnp.float32),
        in_specs=in_specs,
        out_specs=pl.BlockSpec((B, O), lambda: (0, 0)),
    )(*inputs)


# ----------------------------------------------------------------------------
# Parameter init (mirrors PyTorch nn.LSTM / nn.Linear) + kernel-ready prep
# ----------------------------------------------------------------------------
def init_params(key, input_dim, hidden_dim, num_layers, output_dim):
    k_lstm = 1.0 / np.sqrt(hidden_dim)
    params = {"lstm": []}
    for layer in range(num_layers):
        d_in = input_dim if layer == 0 else hidden_dim
        key, k1, k2, k3, k4 = jax.random.split(key, 5)
        w_ih = jax.random.uniform(k1, (4 * hidden_dim, d_in), jnp.float32, -k_lstm, k_lstm)
        w_hh = jax.random.uniform(k2, (4 * hidden_dim, hidden_dim), jnp.float32, -k_lstm, k_lstm)
        b_ih = jax.random.uniform(k3, (4 * hidden_dim,), jnp.float32, -k_lstm, k_lstm)
        b_hh = jax.random.uniform(k4, (4 * hidden_dim,), jnp.float32, -k_lstm, k_lstm)
        params["lstm"].append({
            "w_ih_t": w_ih.T,                        # (d_in, 4H)
            "w_hh_t": w_hh.T,                        # (H, 4H)
            "bias": (b_ih + b_hh)[None, :],          # (1, 4H)
        })
    key, k5, k6 = jax.random.split(key, 3)
    k_fc = 1.0 / np.sqrt(hidden_dim)
    w_fc = jax.random.uniform(k5, (output_dim, hidden_dim), jnp.float32, -k_fc, k_fc)
    b_fc = jax.random.uniform(k6, (output_dim,), jnp.float32, -k_fc, k_fc)
    params["fc"] = {"w_t": w_fc.T, "b": b_fc[None, :]}
    return params


def prepare_kernel_params(params, num_layers):
    """One-off (outside jit) prep: pre-scale i/f/o gate columns by 0.5 so the
    kernel's single-tanh trick realises sigmoid exactly, and fuse [W_ih; W_hh]
    for layers >= 1."""
    H = params["lstm"][0]["w_hh_t"].shape[0]
    scale = jnp.concatenate(
        [jnp.full((1, H), 0.5, jnp.float32),     # i
         jnp.full((1, H), 0.5, jnp.float32),     # f
         jnp.ones((1, H), jnp.float32),          # g (stays tanh)
         jnp.full((1, H), 0.5, jnp.float32)],    # o
        axis=1)                                  # (1, 4H)

    p0 = params["lstm"][0]
    kp = {
        "layer0": {
            "w_ih": p0["w_ih_t"] * scale,
            "w_hh": p0["w_hh_t"] * scale,
            "bias": p0["bias"] * scale,
        },
        "fused": [],
        "fc": {"w_t": params["fc"]["w_t"], "b": params["fc"]["b"]},
    }
    for layer in range(1, num_layers):
        p = params["lstm"][layer]
        w_fused = jnp.concatenate([p["w_ih_t"], p["w_hh_t"]], axis=0) * scale  # (2H, 4H)
        kp["fused"].append({"w": w_fused, "bias": p["bias"] * scale})
    return jax.tree_util.tree_map(lambda a: jnp.asarray(a, jnp.float32), kp)


# ----------------------------------------------------------------------------
# Pure-JAX reference (unmodified math, for correctness check)
# ----------------------------------------------------------------------------
def lstm_model_reference(x, params, num_layers):
    B = x.shape[0]
    layer_in = x  # (B, T, D)
    for layer in range(num_layers):
        p = params["lstm"][layer]
        H = p["w_hh_t"].shape[0]
        h = jnp.zeros((B, H), jnp.float32)
        c = jnp.zeros((B, H), jnp.float32)
        outs = []
        for t in range(x.shape[1]):
            x_t = layer_in[:, t, :]
            gates = x_t @ p["w_ih_t"] + h @ p["w_hh_t"] + p["bias"]
            i_g = jax.nn.sigmoid(gates[:, 0 * H:1 * H])
            f_g = jax.nn.sigmoid(gates[:, 1 * H:2 * H])
            g_g = jnp.tanh(gates[:, 2 * H:3 * H])
            o_g = jax.nn.sigmoid(gates[:, 3 * H:4 * H])
            c = f_g * c + i_g * g_g
            h = o_g * jnp.tanh(c)
            outs.append(h)
        layer_in = jnp.stack(outs, axis=1)
    h_last = layer_in[:, -1, :]
    return h_last @ params["fc"]["w_t"] + params["fc"]["b"]


# ----------------------------------------------------------------------------
# Main
# ----------------------------------------------------------------------------
if __name__ == "__main__":
    input_dim = 4
    hidden_dim = 32
    num_layers = 2
    output_dim = 1
    lookback = 7     # seq length
    batch = 2

    key = jax.random.PRNGKey(0)
    key, pk, xk = jax.random.split(key, 3)
    params = init_params(pk, input_dim, hidden_dim, num_layers, output_dim)
    kparams = prepare_kernel_params(params, num_layers)
    x = jax.random.normal(xk, (batch, lookback, input_dim), jnp.float32)

    out = lstm_model_forward(x, kparams, num_layers)
    out = jax.block_until_ready(out)

    ref = lstm_model_reference(x, params, num_layers)
    assert out.shape == (batch, output_dim), out.shape
    np.testing.assert_allclose(np.asarray(out), np.asarray(ref), rtol=1e-4, atol=1e-5)

    print("KERNEL_OK")
</pallas_src>

<mosaic_0001>
module attributes {stable_mosaic.version = 11 : i64} {
  func.func @kernel(%arg0: memref<2x7x4xf32, #tpu.memory_space<vmem>>, %arg1: memref<4x128xf32, #tpu.memory_space<vmem>>, %arg2: memref<32x128xf32, #tpu.memory_space<vmem>>, %arg3: memref<1x128xf32, #tpu.memory_space<vmem>>, %arg4: memref<64x128xf32, #tpu.memory_space<vmem>>, %arg5: memref<1x128xf32, #tpu.memory_space<vmem>>, %arg6: memref<32x1xf32, #tpu.memory_space<vmem>>, %arg7: memref<1x1xf32, #tpu.memory_space<vmem>>, %arg8: memref<2x1xf32, #tpu.memory_space<vmem>>) attributes {dimension_semantics = [], scalar_prefetch = 0 : i64, scratch_operands = 0 : i64, tpu.core_type = #tpu.core_type<tc>} {
    %c0 = arith.constant 0 : index
    %c0_0 = arith.constant 0 : index
    %0 = vector.load %arg1[%c0, %c0_0] : memref<4x128xf32, #tpu.memory_space<vmem>>, vector<4x128xf32>
    %c0_1 = arith.constant 0 : index
    %c0_2 = arith.constant 0 : index
    %1 = vector.load %arg2[%c0_1, %c0_2] : memref<32x128xf32, #tpu.memory_space<vmem>>, vector<32x128xf32>
    %c0_3 = arith.constant 0 : index
    %c0_4 = arith.constant 0 : index
    %2 = vector.load %arg3[%c0_3, %c0_4] : memref<1x128xf32, #tpu.memory_space<vmem>>, vector<1x128xf32>
    %c0_5 = arith.constant 0 : index
    %c0_6 = arith.constant 0 : index
    %c0_7 = arith.constant 0 : index
    %3 = vector.load %arg0[%c0_5, %c0_6, %c0_7] : memref<2x7x4xf32, #tpu.memory_space<vmem>>, vector<2x7x4xf32>
    %4 = vector.extract_strided_slice %3 {offsets = [0, 0, 0], sizes = [1, 7, 4], strides = [1, 1, 1]} : vector<2x7x4xf32> to vector<1x7x4xf32>
    %5 = vector.shape_cast %4 : vector<1x7x4xf32> to vector<7x4xf32>
    %6 = vector.extract_strided_slice %3 {offsets = [1, 0, 0], sizes = [1, 7, 4], strides = [1, 1, 1]} : vector<2x7x4xf32> to vector<1x7x4xf32>
    %7 = vector.shape_cast %6 : vector<1x7x4xf32> to vector<7x4xf32>
    %8 = tpu.concatenate %5, %7 in 0 : vector<7x4xf32>, vector<7x4xf32> -> vector<14x4xf32>
    %cst = arith.constant dense<0.000000e+00> : vector<14x128xf32>
    %9 = tpu.matmul %8, %0, %cst {dimension_numbers = #tpu.dot_dimension_numbers<[1], [0], [0], [1], [0, 0, 1, 1], [], []>} : vector<14x4xf32>, vector<4x128xf32>, vector<14x128xf32> -> vector<14x128xf32>
    %10 = vector.broadcast %2 : vector<1x128xf32> to vector<14x128xf32>
    %11 = arith.addf %9, %10 : vector<14x128xf32>
    %cst_8 = arith.constant 0.000000e+00 : f32
    %12 = vector.broadcast %cst_8 : f32 to vector<2x32xf32>
    %cst_9 = arith.constant 0.000000e+00 : f32
    %13 = vector.broadcast %cst_9 : f32 to vector<2x32xf32>
    %14 = vector.extract_strided_slice %11 {offsets = [0, 0], sizes = [1, 128], strides = [1, 1]} : vector<14x128xf32> to vector<1x128xf32>
    %15 = vector.extract_strided_slice %11 {offsets = [7, 0], sizes = [1, 128], strides = [1, 1]} : vector<14x128xf32> to vector<1x128xf32>
    %16 = tpu.concatenate %14, %15 in 0 : vector<1x128xf32>, vector<1x128xf32> -> vector<2x128xf32>
    %cst_10 = arith.constant dense<0.000000e+00> : vector<2x128xf32>
    %17 = tpu.matmul %12, %1, %cst_10 {dimension_numbers = #tpu.dot_dimension_numbers<[1], [0], [0], [1], [0, 0, 1, 1], [], []>} : vector<2x32xf32>, vector<32x128xf32>, vector<2x128xf32> -> vector<2x128xf32>
    %18 = arith.addf %16, %17 : vector<2x128xf32>
    %19 = math.tanh %18 : vector<2x128xf32>
    %20 = vector.extract_strided_slice %19 {offsets = [0, 0], sizes = [2, 32], strides = [1, 1]} : vector<2x128xf32> to vector<2x32xf32>
    %cst_11 = arith.constant 5.000000e-01 : f32
    %21 = vector.broadcast %cst_11 : f32 to vector<2x32xf32>
    %22 = arith.mulf %21, %20 : vector<2x32xf32>
    %cst_12 = arith.constant 5.000000e-01 : f32
    %23 = vector.broadcast %cst_12 : f32 to vector<2x32xf32>
    %24 = arith.addf %22, %23 : vector<2x32xf32>
    %25 = vector.extract_strided_slice %19 {offsets = [0, 32], sizes = [2, 32], strides = [1, 1]} : vector<2x128xf32> to vector<2x32xf32>
    %cst_13 = arith.constant 5.000000e-01 : f32
    %26 = vector.broadcast %cst_13 : f32 to vector<2x32xf32>
    %27 = arith.mulf %26, %25 : vector<2x32xf32>
    %cst_14 = arith.constant 5.000000e-01 : f32
    %28 = vector.broadcast %cst_14 : f32 to vector<2x32xf32>
    %29 = arith.addf %27, %28 : vector<2x32xf32>
    %30 = vector.extract_strided_slice %19 {offsets = [0, 64], sizes = [2, 32], strides = [1, 1]} : vector<2x128xf32> to vector<2x32xf32>
    %31 = vector.extract_strided_slice %19 {offsets = [0, 96], sizes = [2, 32], strides = [1, 1]} : vector<2x128xf32> to vector<2x32xf32>
    %cst_15 = arith.constant 5.000000e-01 : f32
    %32 = vector.broadcast %cst_15 : f32 to vector<2x32xf32>
    %33 = arith.mulf %32, %31 : vector<2x32xf32>
    %cst_16 = arith.constant 5.000000e-01 : f32
    %34 = vector.broadcast %cst_16 : f32 to vector<2x32xf32>
    %35 = arith.addf %33, %34 : vector<2x32xf32>
    %36 = arith.mulf %29, %13 : vector<2x32xf32>
    %37 = arith.mulf %24, %30 : vector<2x32xf32>
    %38 = arith.addf %36, %37 : vector<2x32xf32>
    %39 = math.tanh %38 : vector<2x32xf32>
    %40 = arith.mulf %35, %39 : vector<2x32xf32>
    %41 = vector.extract_strided_slice %11 {offsets = [1, 0], sizes = [1, 128], strides = [1, 1]} : vector<14x128xf32> to vector<1x128xf32>
    %42 = vector.extract_strided_slice %11 {offsets = [8, 0], sizes = [1, 128], strides = [1, 1]} : vector<14x128xf32> to vector<1x128xf32>
    %43 = tpu.concatenate %41, %42 in 0 : vector<1x128xf32>, vector<1x128xf32> -> vector<2x128xf32>
    %cst_17 = arith.constant dense<0.000000e+00> : vector<2x128xf32>
    %44 = tpu.matmul %40, %1, %cst_17 {dimension_numbers = #tpu.dot_dimension_numbers<[1], [0], [0], [1], [0, 0, 1, 1], [], []>} : vector<2x32xf32>, vector<32x128xf32>, vector<2x128xf32> -> vector<2x128xf32>
    %45 = arith.addf %43, %44 : vector<2x128xf32>
    %46 = math.tanh %45 : vector<2x128xf32>
    %47 = vector.extract_strided_slice %46 {offsets = [0, 0], sizes = [2, 32], strides = [1, 1]} : vector<2x128xf32> to vector<2x32xf32>
    %cst_18 = arith.constant 5.000000e-01 : f32
    %48 = vector.broadcast %cst_18 : f32 to vector<2x32xf32>
    %49 = arith.mulf %48, %47 : vector<2x32xf32>
    %cst_19 = arith.constant 5.000000e-01 : f32
    %50 = vector.broadcast %cst_19 : f32 to vector<2x32xf32>
    %51 = arith.addf %49, %50 : vector<2x32xf32>
    %52 = vector.extract_strided_slice %46 {offsets = [0, 32], sizes = [2, 32], strides = [1, 1]} : vector<2x128xf32> to vector<2x32xf32>
    %cst_20 = arith.constant 5.000000e-01 : f32
    %53 = vector.broadcast %cst_20 : f32 to vector<2x32xf32>
    %54 = arith.mulf %53, %52 : vector<2x32xf32>
    %cst_21 = arith.constant 5.000000e-01 : f32
    %55 = vector.broadcast %cst_21 : f32 to vector<2x32xf32>
    %56 = arith.addf %54, %55 : vector<2x32xf32>
    %57 = vector.extract_strided_slice %46 {offsets = [0, 64], sizes = [2, 32], strides = [1, 1]} : vector<2x128xf32> to vector<2x32xf32>
    %58 = vector.extract_strided_slice %46 {offsets = [0, 96], sizes = [2, 32], strides = [1, 1]} : vector<2x128xf32> to vector<2x32xf32>
    %cst_22 = arith.constant 5.000000e-01 : f32
    %59 = vector.broadcast %cst_22 : f32 to vector<2x32xf32>
    %60 = arith.mulf %59, %58 : vector<2x32xf32>
    %cst_23 = arith.constant 5.000000e-01 : f32
    %61 = vector.broadcast %cst_23 : f32 to vector<2x32xf32>
    %62 = arith.addf %60, %61 : vector<2x32xf32>
    %63 = arith.mulf %56, %38 : vector<2x32xf32>
    %64 = arith.mulf %51, %57 : vector<2x32xf32>
    %65 = arith.addf %63, %64 : vector<2x32xf32>
    %66 = math.tanh %65 : vector<2x32xf32>
    %67 = arith.mulf %62, %66 : vector<2x32xf32>
    %68 = vector.extract_strided_slice %11 {offsets = [2, 0], sizes = [1, 128], strides = [1, 1]} : vector<14x128xf32> to vector<1x128xf32>
    %69 = vector.extract_strided_slice %11 {offsets = [9, 0], sizes = [1, 128], strides = [1, 1]} : vector<14x128xf32> to vector<1x128xf32>
    %70 = tpu.concatenate %68, %69 in 0 : vector<1x128xf32>, vector<1x128xf32> -> vector<2x128xf32>
    %cst_24 = arith.constant dense<0.000000e+00> : vector<2x128xf32>
    %71 = tpu.matmul %67, %1, %cst_24 {dimension_numbers = #tpu.dot_dimension_numbers<[1], [0], [0], [1], [0, 0, 1, 1], [], []>} : vector<2x32xf32>, vector<32x128xf32>, vector<2x128xf32> -> vector<2x128xf32>
    %72 = arith.addf %70, %71 : vector<2x128xf32>
    %73 = math.tanh %72 : vector<2x128xf32>
    %74 = vector.extract_strided_slice %73 {offsets = [0, 0], sizes = [2, 32], strides = [1, 1]} : vector<2x128xf32> to vector<2x32xf32>
    %cst_25 = arith.constant 5.000000e-01 : f32
    %75 = vector.broadcast %cst_25 : f32 to vector<2x32xf32>
    %76 = arith.mulf %75, %74 : vector<2x32xf32>
    %cst_26 = arith.constant 5.000000e-01 : f32
    %77 = vector.broadcast %cst_26 : f32 to vector<2x32xf32>
    %78 = arith.addf %76, %77 : vector<2x32xf32>
    %79 = vector.extract_strided_slice %73 {offsets = [0, 32], sizes = [2, 32], strides = [1, 1]} : vector<2x128xf32> to vector<2x32xf32>
    %cst_27 = arith.constant 5.000000e-01 : f32
    %80 = vector.broadcast %cst_27 : f32 to vector<2x32xf32>
    %81 = arith.mulf %80, %79 : vector<2x32xf32>
    %cst_28 = arith.constant 5.000000e-01 : f32
    %82 = vector.broadcast %cst_28 : f32 to vector<2x32xf32>
    %83 = arith.addf %81, %82 : vector<2x32xf32>
    %84 = vector.extract_strided_slice %73 {offsets = [0, 64], sizes = [2, 32], strides = [1, 1]} : vector<2x128xf32> to vector<2x32xf32>
    %85 = vector.extract_strided_slice %73 {offsets = [0, 96], sizes = [2, 32], strides = [1, 1]} : vector<2x128xf32> to vector<2x32xf32>
    %cst_29 = arith.constant 5.000000e-01 : f32
    %86 = vector.broadcast %cst_29 : f32 to vector<2x32xf32>
    %87 = arith.mulf %86, %85 : vector<2x32xf32>
    %cst_30 = arith.constant 5.000000e-01 : f32
    %88 = vector.broadcast %cst_30 : f32 to vector<2x32xf32>
    %89 = arith.addf %87, %88 : vector<2x32xf32>
    %90 = arith.mulf %83, %65 : vector<2x32xf32>
    %91 = arith.mulf %78, %84 : vector<2x32xf32>
    %92 = arith.addf %90, %91 : vector<2x32xf32>
    %93 = math.tanh %92 : vector<2x32xf32>
    %94 = arith.mulf %89, %93 : vector<2x32xf32>
    %95 = vector.extract_strided_slice %11 {offsets = [3, 0], sizes = [1, 128], strides = [1, 1]} : vector<14x128xf32> to vector<1x128xf32>
    %96 = vector.extract_strided_slice %11 {offsets = [10, 0], sizes = [1, 128], strides = [1, 1]} : vector<14x128xf32> to vector<1x128xf32>
    %97 = tpu.concatenate %95, %96 in 0 : vector<1x128xf32>, vector<1x128xf32> -> vector<2x128xf32>
    %cst_31 = arith.constant dense<0.000000e+00> : vector<2x128xf32>
    %98 = tpu.matmul %94, %1, %cst_31 {dimension_numbers = #tpu.dot_dimension_numbers<[1], [0], [0], [1], [0, 0, 1, 1], [], []>} : vector<2x32xf32>, vector<32x128xf32>, vector<2x128xf32> -> vector<2x128xf32>
    %99 = arith.addf %97, %98 : vector<2x128xf32>
    %100 = math.tanh %99 : vector<2x128xf32>
    %101 = vector.extract_strided_slice %100 {offsets = [0, 0], sizes = [2, 32], strides = [1, 1]} : vector<2x128xf32> to vector<2x32xf32>
    %cst_32 = arith.constant 5.000000e-01 : f32
    %102 = vector.broadcast %cst_32 : f32 to vector<2x32xf32>
    %103 = arith.mulf %102, %101 : vector<2x32xf32>
    %cst_33 = arith.constant 5.000000e-01 : f32
    %104 = vector.broadcast %cst_33 : f32 to vector<2x32xf32>
    %105 = arith.addf %103, %104 : vector<2x32xf32>
    %106 = vector.extract_strided_slice %100 {offsets = [0, 32], sizes = [2, 32], strides = [1, 1]} : vector<2x128xf32> to vector<2x32xf32>
    %cst_34 = arith.constant 5.000000e-01 : f32
    %107 = vector.broadcast %cst_34 : f32 to vector<2x32xf32>
    %108 = arith.mulf %107, %106 : vector<2x32xf32>
    %cst_35 = arith.constant 5.000000e-01 : f32
    %109 = vector.broadcast %cst_35 : f32 to vector<2x32xf32>
    %110 = arith.addf %108, %109 : vector<2x32xf32>
    %111 = vector.extract_strided_slice %100 {offsets = [0, 64], sizes = [2, 32], strides = [1, 1]} : vector<2x128xf32> to vector<2x32xf32>
    %112 = vector.extract_strided_slice %100 {offsets = [0, 96], sizes = [2, 32], strides = [1, 1]} : vector<2x128xf32> to vector<2x32xf32>
    %cst_36 = arith.constant 5.000000e-01 : f32
    %113 = vector.broadcast %cst_36 : f32 to vector<2x32xf32>
    %114 = arith.mulf %113, %112 : vector<2x32xf32>
    %cst_37 = arith.constant 5.000000e-01 : f32
    %115 = vector.broadcast %cst_37 : f32 to vector<2x32xf32>
    %116 = arith.addf %114, %115 : vector<2x32xf32>
    %117 = arith.mulf %110, %92 : vector<2x32xf32>
    %118 = arith.mulf %105, %111 : vector<2x32xf32>
    %119 = arith.addf %117, %118 : vector<2x32xf32>
    %120 = math.tanh %119 : vector<2x32xf32>
    %121 = arith.mulf %116, %120 : vector<2x32xf32>
    %122 = vector.extract_strided_slice %11 {offsets = [4, 0], sizes = [1, 128], strides = [1, 1]} : vector<14x128xf32> to vector<1x128xf32>
    %123 = vector.extract_strided_slice %11 {offsets = [11, 0], sizes = [1, 128], strides = [1, 1]} : vector<14x128xf32> to vector<1x128xf32>
    %124 = tpu.concatenate %122, %123 in 0 : vector<1x128xf32>, vector<1x128xf32> -> vector<2x128xf32>
    %cst_38 = arith.constant dense<0.000000e+00> : vector<2x128xf32>
    %125 = tpu.matmul %121, %1, %cst_38 {dimension_numbers = #tpu.dot_dimension_numbers<[1], [0], [0], [1], [0, 0, 1, 1], [], []>} : vector<2x32xf32>, vector<32x128xf32>, vector<2x128xf32> -> vector<2x128xf32>
    %126 = arith.addf %124, %125 : vector<2x128xf32>
    %127 = math.tanh %126 : vector<2x128xf32>
    %128 = vector.extract_strided_slice %127 {offsets = [0, 0], sizes = [2, 32], strides = [1, 1]} : vector<2x128xf32> to vector<2x32xf32>
    %cst_39 = arith.constant 5.000000e-01 : f32
    %129 = vector.broadcast %cst_39 : f32 to vector<2x32xf32>
    %130 = arith.mulf %129, %128 : vector<2x32xf32>
    %cst_40 = arith.constant 5.000000e-01 : f32
    %131 = vector.broadcast %cst_40 : f32 to vector<2x32xf32>
    %132 = arith.addf %130, %131 : vector<2x32xf32>
    %133 = vector.extract_strided_slice %127 {offsets = [0, 32], sizes = [2, 32], strides = [1, 1]} : vector<2x128xf32> to vector<2x32xf32>
    %cst_41 = arith.constant 5.000000e-01 : f32
    %134 = vector.broadcast %cst_41 : f32 to vector<2x32xf32>
    %135 = arith.mulf %134, %133 : vector<2x32xf32>
    %cst_42 = arith.constant 5.000000e-01 : f32
    %136 = vector.broadcast %cst_42 : f32 to vector<2x32xf32>
    %137 = arith.addf %135, %136 : vector<2x32xf32>
    %138 = vector.extract_strided_slice %127 {offsets = [0, 64], sizes = [2, 32], strides = [1, 1]} : vector<2x128xf32> to vector<2x32xf32>
    %139 = vector.extract_strided_slice %127 {offsets = [0, 96], sizes = [2, 32], strides = [1, 1]} : vector<2x128xf32> to vector<2x32xf32>
    %cst_43 = arith.constant 5.000000e-01 : f32
    %140 = vector.broadcast %cst_43 : f32 to vector<2x32xf32>
    %141 = arith.mulf %140, %139 : vector<2x32xf32>
    %cst_44 = arith.constant 5.000000e-01 : f32
    %142 = vector.broadcast %cst_44 : f32 to vector<2x32xf32>
    %143 = arith.addf %141, %142 : vector<2x32xf32>
    %144 = arith.mulf %137, %119 : vector<2x32xf32>
    %145 = arith.mulf %132, %138 : vector<2x32xf32>
    %146 = arith.addf %144, %145 : vector<2x32xf32>
    %147 = math.tanh %146 : vector<2x32xf32>
    %148 = arith.mulf %143, %147 : vector<2x32xf32>
    %149 = vector.extract_strided_slice %11 {offsets = [5, 0], sizes = [1, 128], strides = [1, 1]} : vector<14x128xf32> to vector<1x128xf32>
    %150 = vector.extract_strided_slice %11 {offsets = [12, 0], sizes = [1, 128], strides = [1, 1]} : vector<14x128xf32> to vector<1x128xf32>
    %151 = tpu.concatenate %149, %150 in 0 : vector<1x128xf32>, vector<1x128xf32> -> vector<2x128xf32>
    %cst_45 = arith.constant dense<0.000000e+00> : vector<2x128xf32>
    %152 = tpu.matmul %148, %1, %cst_45 {dimension_numbers = #tpu.dot_dimension_numbers<[1], [0], [0], [1], [0, 0, 1, 1], [], []>} : vector<2x32xf32>, vector<32x128xf32>, vector<2x128xf32> -> vector<2x128xf32>
    %153 = arith.addf %151, %152 : vector<2x128xf32>
    %154 = math.tanh %153 : vector<2x128xf32>
    %155 = vector.extract_strided_slice %154 {offsets = [0, 0], sizes = [2, 32], strides = [1, 1]} : vector<2x128xf32> to vector<2x32xf32>
    %cst_46 = arith.constant 5.000000e-01 : f32
    %156 = vector.broadcast %cst_46 : f32 to vector<2x32xf32>
    %157 = arith.mulf %156, %155 : vector<2x32xf32>
    %cst_47 = arith.constant 5.000000e-01 : f32
    %158 = vector.broadcast %cst_47 : f32 to vector<2x32xf32>
    %159 = arith.addf %157, %158 : vector<2x32xf32>
    %160 = vector.extract_strided_slice %154 {offsets = [0, 32], sizes = [2, 32], strides = [1, 1]} : vector<2x128xf32> to vector<2x32xf32>
    %cst_48 = arith.constant 5.000000e-01 : f32
    %161 = vector.broadcast %cst_48 : f32 to vector<2x32xf32>
    %162 = arith.mulf %161, %160 : vector<2x32xf32>
    %cst_49 = arith.constant 5.000000e-01 : f32
    %163 = vector.broadcast %cst_49 : f32 to vector<2x32xf32>
    %164 = arith.addf %162, %163 : vector<2x32xf32>
    %165 = vector.extract_strided_slice %154 {offsets = [0, 64], sizes = [2, 32], strides = [1, 1]} : vector<2x128xf32> to vector<2x32xf32>
    %166 = vector.extract_strided_slice %154 {offsets = [0, 96], sizes = [2, 32], strides = [1, 1]} : vector<2x128xf32> to vector<2x32xf32>
    %cst_50 = arith.constant 5.000000e-01 : f32
    %167 = vector.broadcast %cst_50 : f32 to vector<2x32xf32>
    %168 = arith.mulf %167, %166 : vector<2x32xf32>
    %cst_51 = arith.constant 5.000000e-01 : f32
    %169 = vector.broadcast %cst_51 : f32 to vector<2x32xf32>
    %170 = arith.addf %168, %169 : vector<2x32xf32>
    %171 = arith.mulf %164, %146 : vector<2x32xf32>
    %172 = arith.mulf %159, %165 : vector<2x32xf32>
    %173 = arith.addf %171, %172 : vector<2x32xf32>
    %174 = math.tanh %173 : vector<2x32xf32>
    %175 = arith.mulf %170, %174 : vector<2x32xf32>
    %176 = vector.extract_strided_slice %11 {offsets = [6, 0], sizes = [1, 128], strides = [1, 1]} : vector<14x128xf32> to vector<1x128xf32>
    %177 = vector.extract_strided_slice %11 {offsets = [13, 0], sizes = [1, 128], strides = [1, 1]} : vector<14x128xf32> to vector<1x128xf32>
    %178 = tpu.concatenate %176, %177 in 0 : vector<1x128xf32>, vector<1x128xf32> -> vector<2x128xf32>
    %cst_52 = arith.constant dense<0.000000e+00> : vector<2x128xf32>
    %179 = tpu.matmul %175, %1, %cst_52 {dimension_numbers = #tpu.dot_dimension_numbers<[1], [0], [0], [1], [0, 0, 1, 1], [], []>} : vector<2x32xf32>, vector<32x128xf32>, vector<2x128xf32> -> vector<2x128xf32>
    %180 = arith.addf %178, %179 : vector<2x128xf32>
    %181 = math.tanh %180 : vector<2x128xf32>
    %182 = vector.extract_strided_slice %181 {offsets = [0, 0], sizes = [2, 32], strides = [1, 1]} : vector<2x128xf32> to vector<2x32xf32>
    %cst_53 = arith.constant 5.000000e-01 : f32
    %183 = vector.broadcast %cst_53 : f32 to vector<2x32xf32>
    %184 = arith.mulf %183, %182 : vector<2x32xf32>
    %cst_54 = arith.constant 5.000000e-01 : f32
    %185 = vector.broadcast %cst_54 : f32 to vector<2x32xf32>
    %186 = arith.addf %184, %185 : vector<2x32xf32>
    %187 = vector.extract_strided_slice %181 {offsets = [0, 32], sizes = [2, 32], strides = [1, 1]} : vector<2x128xf32> to vector<2x32xf32>
    %cst_55 = arith.constant 5.000000e-01 : f32
    %188 = vector.broadcast %cst_55 : f32 to vector<2x32xf32>
    %189 = arith.mulf %188, %187 : vector<2x32xf32>
    %cst_56 = arith.constant 5.000000e-01 : f32
    %190 = vector.broadcast %cst_56 : f32 to vector<2x32xf32>
    %191 = arith.addf %189, %190 : vector<2x32xf32>
    %192 = vector.extract_strided_slice %181 {offsets = [0, 64], sizes = [2, 32], strides = [1, 1]} : vector<2x128xf32> to vector<2x32xf32>
    %193 = vector.extract_strided_slice %181 {offsets = [0, 96], sizes = [2, 32], strides = [1, 1]} : vector<2x128xf32> to vector<2x32xf32>
    %cst_57 = arith.constant 5.000000e-01 : f32
    %194 = vector.broadcast %cst_57 : f32 to vector<2x32xf32>
    %195 = arith.mulf %194, %193 : vector<2x32xf32>
    %cst_58 = arith.constant 5.000000e-01 : f32
    %196 = vector.broadcast %cst_58 : f32 to vector<2x32xf32>
    %197 = arith.addf %195, %196 : vector<2x32xf32>
    %198 = arith.mulf %191, %173 : vector<2x32xf32>
    %199 = arith.mulf %186, %192 : vector<2x32xf32>
    %200 = arith.addf %198, %199 : vector<2x32xf32>
    %201 = math.tanh %200 : vector<2x32xf32>
    %202 = arith.mulf %197, %201 : vector<2x32xf32>
    %c0_59 = arith.constant 0 : index
    %c0_60 = arith.constant 0 : index
    %203 = vector.load %arg4[%c0_59, %c0_60] : memref<64x128xf32, #tpu.memory_space<vmem>>, vector<64x128xf32>
    %c0_61 = arith.constant 0 : index
    %c0_62 = arith.constant 0 : index
    %204 = vector.load %arg5[%c0_61, %c0_62] : memref<1x128xf32, #tpu.memory_space<vmem>>, vector<1x128xf32>
    %cst_63 = arith.constant 0.000000e+00 : f32
    %205 = vector.broadcast %cst_63 : f32 to vector<2x32xf32>
    %cst_64 = arith.constant 0.000000e+00 : f32
    %206 = vector.broadcast %cst_64 : f32 to vector<2x32xf32>
    %207 = tpu.concatenate %40, %205 in 1 : vector<2x32xf32>, vector<2x32xf32> -> vector<2x64xf32>
    %cst_65 = arith.constant dense<0.000000e+00> : vector<2x128xf32>
    %208 = tpu.matmul %207, %203, %cst_65 {dimension_numbers = #tpu.dot_dimension_numbers<[1], [0], [0], [1], [0, 0, 1, 1], [], []>} : vector<2x64xf32>, vector<64x128xf32>, vector<2x128xf32> -> vector<2x128xf32>
    %209 = vector.broadcast %204 : vector<1x128xf32> to vector<2x128xf32>
    %210 = arith.addf %208, %209 : vector<2x128xf32>
    %211 = math.tanh %210 : vector<2x128xf32>
    %212 = vector.extract_strided_slice %211 {offsets = [0, 0], sizes = [2, 32], strides = [1, 1]} : vector<2x128xf32> to vector<2x32xf32>
    %cst_66 = arith.constant 5.000000e-01 : f32
    %213 = vector.broadcast %cst_66 : f32 to vector<2x32xf32>
    %214 = arith.mulf %213, %212 : vector<2x32xf32>
    %cst_67 = arith.constant 5.000000e-01 : f32
    %215 = vector.broadcast %cst_67 : f32 to vector<2x32xf32>
    %216 = arith.addf %214, %215 : vector<2x32xf32>
    %217 = vector.extract_strided_slice %211 {offsets = [0, 32], sizes = [2, 32], strides = [1, 1]} : vector<2x128xf32> to vector<2x32xf32>
    %cst_68 = arith.constant 5.000000e-01 : f32
    %218 = vector.broadcast %cst_68 : f32 to vector<2x32xf32>
    %219 = arith.mulf %218, %217 : vector<2x32xf32>
    %cst_69 = arith.constant 5.000000e-01 : f32
    %220 = vector.broadcast %cst_69 : f32 to vector<2x32xf32>
    %221 = arith.addf %219, %220 : vector<2x32xf32>
    %222 = vector.extract_strided_slice %211 {offsets = [0, 64], sizes = [2, 32], strides = [1, 1]} : vector<2x128xf32> to vector<2x32xf32>
    %223 = vector.extract_strided_slice %211 {offsets = [0, 96], sizes = [2, 32], strides = [1, 1]} : vector<2x128xf32> to vector<2x32xf32>
    %cst_70 = arith.constant 5.000000e-01 : f32
    %224 = vector.broadcast %cst_70 : f32 to vector<2x32xf32>
    %225 = arith.mulf %224, %223 : vector<2x32xf32>
    %cst_71 = arith.constant 5.000000e-01 : f32
    %226 = vector.broadcast %cst_71 : f32 to vector<2x32xf32>
    %227 = arith.addf %225, %226 : vector<2x32xf32>
    %228 = arith.mulf %221, %206 : vector<2x32xf32>
    %229 = arith.mulf %216, %222 : vector<2x32xf32>
    %230 = arith.addf %228, %229 : vector<2x32xf32>
    %231 = math.tanh %230 : vector<2x32xf32>
    %232 = arith.mulf %227, %231 : vector<2x32xf32>
    %233 = tpu.concatenate %67, %232 in 1 : vector<2x32xf32>, vector<2x32xf32> -> vector<2x64xf32>
    %cst_72 = arith.constant dense<0.000000e+00> : vector<2x128xf32>
    %234 = tpu.matmul %233, %203, %cst_72 {dimension_numbers = #tpu.dot_dimension_numbers<[1], [0], [0], [1], [0, 0, 1, 1], [], []>} : vector<2x64xf32>, vector<64x128xf32>, vector<2x128xf32> -> vector<2x128xf32>
    %235 = vector.broadcast %204 : vector<1x128xf32> to vector<2x128xf32>
    %236 = arith.addf %234, %235 : vector<2x128xf32>
    %237 = math.tanh %236 : vector<2x128xf32>
    %238 = vector.extract_strided_slice %237 {offsets = [0, 0], sizes = [2, 32], strides = [1, 1]} : vector<2x128xf32> to vector<2x32xf32>
    %cst_73 = arith.constant 5.000000e-01 : f32
    %239 = vector.broadcast %cst_73 : f32 to vector<2x32xf32>
    %240 = arith.mulf %239, %238 : vector<2x32xf32>
    %cst_74 = arith.constant 5.000000e-01 : f32
    %241 = vector.broadcast %cst_74 : f32 to vector<2x32xf32>
    %242 = arith.addf %240, %241 : vector<2x32xf32>
    %243 = vector.extract_strided_slice %237 {offsets = [0, 32], sizes = [2, 32], strides = [1, 1]} : vector<2x128xf32> to vector<2x32xf32>
    %cst_75 = arith.constant 5.000000e-01 : f32
    %244 = vector.broadcast %cst_75 : f32 to vector<2x32xf32>
    %245 = arith.mulf %244, %243 : vector<2x32xf32>
    %cst_76 = arith.constant 5.000000e-01 : f32
    %246 = vector.broadcast %cst_76 : f32 to vector<2x32xf32>
    %247 = arith.addf %245, %246 : vector<2x32xf32>
    %248 = vector.extract_strided_slice %237 {offsets = [0, 64], sizes = [2, 32], strides = [1, 1]} : vector<2x128xf32> to vector<2x32xf32>
    %249 = vector.extract_strided_slice %237 {offsets = [0, 96], sizes = [2, 32], strides = [1, 1]} : vector<2x128xf32> to vector<2x32xf32>
    %cst_77 = arith.constant 5.000000e-01 : f32
    %250 = vector.broadcast %cst_77 : f32 to vector<2x32xf32>
    %251 = arith.mulf %250, %249 : vector<2x32xf32>
    %cst_78 = arith.constant 5.000000e-01 : f32
    %252 = vector.broadcast %cst_78 : f32 to vector<2x32xf32>
    %253 = arith.addf %251, %252 : vector<2x32xf32>
    %254 = arith.mulf %247, %230 : vector<2x32xf32>
    %255 = arith.mulf %242, %248 : vector<2x32xf32>
    %256 = arith.addf %254, %255 : vector<2x32xf32>
    %257 = math.tanh %256 : vector<2x32xf32>
    %258 = arith.mulf %253, %257 : vector<2x32xf32>
    %259 = tpu.concatenate %94, %258 in 1 : vector<2x32xf32>, vector<2x32xf32> -> vector<2x64xf32>
    %cst_79 = arith.constant dense<0.000000e+00> : vector<2x128xf32>
    %260 = tpu.matmul %259, %203, %cst_79 {dimension_numbers = #tpu.dot_dimension_numbers<[1], [0], [0], [1], [0, 0, 1, 1], [], []>} : vector<2x64xf32>, vector<64x128xf32>, vector<2x128xf32> -> vector<2x128xf32>
    %261 = vector.broadcast %204 : vector<1x128xf32> to vector<2x128xf32>
    %262 = arith.addf %260, %261 : vector<2x128xf32>
    %263 = math.tanh %262 : vector<2x128xf32>
    %264 = vector.extract_strided_slice %263 {offsets = [0, 0], sizes = [2, 32], strides = [1, 1]} : vector<2x128xf32> to vector<2x32xf32>
    %cst_80 = arith.constant 5.000000e-01 : f32
    %265 = vector.broadcast %cst_80 : f32 to vector<2x32xf32>
    %266 = arith.mulf %265, %264 : vector<2x32xf32>
    %cst_81 = arith.constant 5.000000e-01 : f32
    %267 = vector.broadcast %cst_81 : f32 to vector<2x32xf32>
    %268 = arith.addf %266, %267 : vector<2x32xf32>
    %269 = vector.extract_strided_slice %263 {offsets = [0, 32], sizes = [2, 32], strides = [1, 1]} : vector<2x128xf32> to vector<2x32xf32>
    %cst_82 = arith.constant 5.000000e-01 : f32
    %270 = vector.broadcast %cst_82 : f32 to vector<2x32xf32>
    %271 = arith.mulf %270, %269 : vector<2x32xf32>
    %cst_83 = arith.constant 5.000000e-01 : f32
    %272 = vector.broadcast %cst_83 : f32 to vector<2x32xf32>
    %273 = arith.addf %271, %272 : vector<2x32xf32>
    %274 = vector.extract_strided_slice %263 {offsets = [0, 64], sizes = [2, 32], strides = [1, 1]} : vector<2x128xf32> to vector<2x32xf32>
    %275 = vector.extract_strided_slice %263 {offsets = [0, 96], sizes = [2, 32], strides = [1, 1]} : vector<2x128xf32> to vector<2x32xf32>
    %cst_84 = arith.constant 5.000000e-01 : f32
    %276 = vector.broadcast %cst_84 : f32 to vector<2x32xf32>
    %277 = arith.mulf %276, %275 : vector<2x32xf32>
    %cst_85 = arith.constant 5.000000e-01 : f32
    %278 = vector.broadcast %cst_85 : f32 to vector<2x32xf32>
    %279 = arith.addf %277, %278 : vector<2x32xf32>
    %280 = arith.mulf %273, %256 : vector<2x32xf32>
    %281 = arith.mulf %268, %274 : vector<2x32xf32>
    %282 = arith.addf %280, %281 : vector<2x32xf32>
    %283 = math.tanh %282 : vector<2x32xf32>
    %284 = arith.mulf %279, %283 : vector<2x32xf32>
    %285 = tpu.concatenate %121, %284 in 1 : vector<2x32xf32>, vector<2x32xf32> -> vector<2x64xf32>
    %cst_86 = arith.constant dense<0.000000e+00> : vector<2x128xf32>
    %286 = tpu.matmul %285, %203, %cst_86 {dimension_numbers = #tpu.dot_dimension_numbers<[1], [0], [0], [1], [0, 0, 1, 1], [], []>} : vector<2x64xf32>, vector<64x128xf32>, vector<2x128xf32> -> vector<2x128xf32>
    %287 = vector.broadcast %204 : vector<1x128xf32> to vector<2x128xf32>
    %288 = arith.addf %286, %287 : vector<2x128xf32>
    %289 = math.tanh %288 : vector<2x128xf32>
    %290 = vector.extract_strided_slice %289 {offsets = [0, 0], sizes = [2, 32], strides = [1, 1]} : vector<2x128xf32> to vector<2x32xf32>
    %cst_87 = arith.constant 5.000000e-01 : f32
    %291 = vector.broadcast %cst_87 : f32 to vector<2x32xf32>
    %292 = arith.mulf %291, %290 : vector<2x32xf32>
    %cst_88 = arith.constant 5.000000e-01 : f32
    %293 = vector.broadcast %cst_88 : f32 to vector<2x32xf32>
    %294 = arith.addf %292, %293 : vector<2x32xf32>
    %295 = vector.extract_strided_slice %289 {offsets = [0, 32], sizes = [2, 32], strides = [1, 1]} : vector<2x128xf32> to vector<2x32xf32>
    %cst_89 = arith.constant 5.000000e-01 : f32
    %296 = vector.broadcast %cst_89 : f32 to vector<2x32xf32>
    %297 = arith.mulf %296, %295 : vector<2x32xf32>
    %cst_90 = arith.constant 5.000000e-01 : f32
    %298 = vector.broadcast %cst_90 : f32 to vector<2x32xf32>
    %299 = arith.addf %297, %298 : vector<2x32xf32>
    %300 = vector.extract_strided_slice %289 {offsets = [0, 64], sizes = [2, 32], strides = [1, 1]} : vector<2x128xf32> to vector<2x32xf32>
    %301 = vector.extract_strided_slice %289 {offsets = [0, 96], sizes = [2, 32], strides = [1, 1]} : vector<2x128xf32> to vector<2x32xf32>
    %cst_91 = arith.constant 5.000000e-01 : f32
    %302 = vector.broadcast %cst_91 : f32 to vector<2x32xf32>
    %303 = arith.mulf %302, %301 : vector<2x32xf32>
    %cst_92 = arith.constant 5.000000e-01 : f32
    %304 = vector.broadcast %cst_92 : f32 to vector<2x32xf32>
    %305 = arith.addf %303, %304 : vector<2x32xf32>
    %306 = arith.mulf %299, %282 : vector<2x32xf32>
    %307 = arith.mulf %294, %300 : vector<2x32xf32>
    %308 = arith.addf %306, %307 : vector<2x32xf32>
    %309 = math.tanh %308 : vector<2x32xf32>
    %310 = arith.mulf %305, %309 : vector<2x32xf32>
    %311 = tpu.concatenate %148, %310 in 1 : vector<2x32xf32>, vector<2x32xf32> -> vector<2x64xf32>
    %cst_93 = arith.constant dense<0.000000e+00> : vector<2x128xf32>
    %312 = tpu.matmul %311, %203, %cst_93 {dimension_numbers = #tpu.dot_dimension_numbers<[1], [0], [0], [1], [0, 0, 1, 1], [], []>} : vector<2x64xf32>, vector<64x128xf32>, vector<2x128xf32> -> vector<2x128xf32>
    %313 = vector.broadcast %204 : vector<1x128xf32> to vector<2x128xf32>
    %314 = arith.addf %312, %313 : vector<2x128xf32>
    %315 = math.tanh %314 : vector<2x128xf32>
    %316 = vector.extract_strided_slice %315 {offsets = [0, 0], sizes = [2, 32], strides = [1, 1]} : vector<2x128xf32> to vector<2x32xf32>
    %cst_94 = arith.constant 5.000000e-01 : f32
    %317 = vector.broadcast %cst_94 : f32 to vector<2x32xf32>
    %318 = arith.mulf %317, %316 : vector<2x32xf32>
    %cst_95 = arith.constant 5.000000e-01 : f32
    %319 = vector.broadcast %cst_95 : f32 to vector<2x32xf32>
    %320 = arith.addf %318, %319 : vector<2x32xf32>
    %321 = vector.extract_strided_slice %315 {offsets = [0, 32], sizes = [2, 32], strides = [1, 1]} : vector<2x128xf32> to vector<2x32xf32>
    %cst_96 = arith.constant 5.000000e-01 : f32
    %322 = vector.broadcast %cst_96 : f32 to vector<2x32xf32>
    %323 = arith.mulf %322, %321 : vector<2x32xf32>
    %cst_97 = arith.constant 5.000000e-01 : f32
    %324 = vector.broadcast %cst_97 : f32 to vector<2x32xf32>
    %325 = arith.addf %323, %324 : vector<2x32xf32>
    %326 = vector.extract_strided_slice %315 {offsets = [0, 64], sizes = [2, 32], strides = [1, 1]} : vector<2x128xf32> to vector<2x32xf32>
    %327 = vector.extract_strided_slice %315 {offsets = [0, 96], sizes = [2, 32], strides = [1, 1]} : vector<2x128xf32> to vector<2x32xf32>
    %cst_98 = arith.constant 5.000000e-01 : f32
    %328 = vector.broadcast %cst_98 : f32 to vector<2x32xf32>
    %329 = arith.mulf %328, %327 : vector<2x32xf32>
    %cst_99 = arith.constant 5.000000e-01 : f32
    %330 = vector.broadcast %cst_99 : f32 to vector<2x32xf32>
    %331 = arith.addf %329, %330 : vector<2x32xf32>
    %332 = arith.mulf %325, %308 : vector<2x32xf32>
    %333 = arith.mulf %320, %326 : vector<2x32xf32>
    %334 = arith.addf %332, %333 : vector<2x32xf32>
    %335 = math.tanh %334 : vector<2x32xf32>
    %336 = arith.mulf %331, %335 : vector<2x32xf32>
    %337 = tpu.concatenate %175, %336 in 1 : vector<2x32xf32>, vector<2x32xf32> -> vector<2x64xf32>
    %cst_100 = arith.constant dense<0.000000e+00> : vector<2x128xf32>
    %338 = tpu.matmul %337, %203, %cst_100 {dimension_numbers = #tpu.dot_dimension_numbers<[1], [0], [0], [1], [0, 0, 1, 1], [], []>} : vector<2x64xf32>, vector<64x128xf32>, vector<2x128xf32> -> vector<2x128xf32>
    %339 = vector.broadcast %204 : vector<1x128xf32> to vector<2x128xf32>
    %340 = arith.addf %338, %339 : vector<2x128xf32>
    %341 = math.tanh %340 : vector<2x128xf32>
    %342 = vector.extract_strided_slice %341 {offsets = [0, 0], sizes = [2, 32], strides = [1, 1]} : vector<2x128xf32> to vector<2x32xf32>
    %cst_101 = arith.constant 5.000000e-01 : f32
    %343 = vector.broadcast %cst_101 : f32 to vector<2x32xf32>
    %344 = arith.mulf %343, %342 : vector<2x32xf32>
    %cst_102 = arith.constant 5.000000e-01 : f32
    %345 = vector.broadcast %cst_102 : f32 to vector<2x32xf32>
    %346 = arith.addf %344, %345 : vector<2x32xf32>
    %347 = vector.extract_strided_slice %341 {offsets = [0, 32], sizes = [2, 32], strides = [1, 1]} : vector<2x128xf32> to vector<2x32xf32>
    %cst_103 = arith.constant 5.000000e-01 : f32
    %348 = vector.broadcast %cst_103 : f32 to vector<2x32xf32>
    %349 = arith.mulf %348, %347 : vector<2x32xf32>
    %cst_104 = arith.constant 5.000000e-01 : f32
    %350 = vector.broadcast %cst_104 : f32 to vector<2x32xf32>
    %351 = arith.addf %349, %350 : vector<2x32xf32>
    %352 = vector.extract_strided_slice %341 {offsets = [0, 64], sizes = [2, 32], strides = [1, 1]} : vector<2x128xf32> to vector<2x32xf32>
    %353 = vector.extract_strided_slice %341 {offsets = [0, 96], sizes = [2, 32], strides = [1, 1]} : vector<2x128xf32> to vector<2x32xf32>
    %cst_105 = arith.constant 5.000000e-01 : f32
    %354 = vector.broadcast %cst_105 : f32 to vector<2x32xf32>
    %355 = arith.mulf %354, %353 : vector<2x32xf32>
    %cst_106 = arith.constant 5.000000e-01 : f32
    %356 = vector.broadcast %cst_106 : f32 to vector<2x32xf32>
    %357 = arith.addf %355, %356 : vector<2x32xf32>
    %358 = arith.mulf %351, %334 : vector<2x32xf32>
    %359 = arith.mulf %346, %352 : vector<2x32xf32>
    %360 = arith.addf %358, %359 : vector<2x32xf32>
    %361 = math.tanh %360 : vector<2x32xf32>
    %362 = arith.mulf %357, %361 : vector<2x32xf32>
    %363 = tpu.concatenate %202, %362 in 1 : vector<2x32xf32>, vector<2x32xf32> -> vector<2x64xf32>
    %cst_107 = arith.constant dense<0.000000e+00> : vector<2x128xf32>
    %364 = tpu.matmul %363, %203, %cst_107 {dimension_numbers = #tpu.dot_dimension_numbers<[1], [0], [0], [1], [0, 0, 1, 1], [], []>} : vector<2x64xf32>, vector<64x128xf32>, vector<2x128xf32> -> vector<2x128xf32>
    %365 = vector.broadcast %204 : vector<1x128xf32> to vector<2x128xf32>
    %366 = arith.addf %364, %365 : vector<2x128xf32>
    %367 = math.tanh %366 : vector<2x128xf32>
    %368 = vector.extract_strided_slice %367 {offsets = [0, 0], sizes = [2, 32], strides = [1, 1]} : vector<2x128xf32> to vector<2x32xf32>
    %cst_108 = arith.constant 5.000000e-01 : f32
    %369 = vector.broadcast %cst_108 : f32 to vector<2x32xf32>
    %370 = arith.mulf %369, %368 : vector<2x32xf32>
    %cst_109 = arith.constant 5.000000e-01 : f32
    %371 = vector.broadcast %cst_109 : f32 to vector<2x32xf32>
    %372 = arith.addf %370, %371 : vector<2x32xf32>
    %373 = vector.extract_strided_slice %367 {offsets = [0, 32], sizes = [2, 32], strides = [1, 1]} : vector<2x128xf32> to vector<2x32xf32>
    %cst_110 = arith.constant 5.000000e-01 : f32
    %374 = vector.broadcast %cst_110 : f32 to vector<2x32xf32>
    %375 = arith.mulf %374, %373 : vector<2x32xf32>
    %cst_111 = arith.constant 5.000000e-01 : f32
    %376 = vector.broadcast %cst_111 : f32 to vector<2x32xf32>
    %377 = arith.addf %375, %376 : vector<2x32xf32>
    %378 = vector.extract_strided_slice %367 {offsets = [0, 64], sizes = [2, 32], strides = [1, 1]} : vector<2x128xf32> to vector<2x32xf32>
    %379 = vector.extract_strided_slice %367 {offsets = [0, 96], sizes = [2, 32], strides = [1, 1]} : vector<2x128xf32> to vector<2x32xf32>
    %cst_112 = arith.constant 5.000000e-01 : f32
    %380 = vector.broadcast %cst_112 : f32 to vector<2x32xf32>
    %381 = arith.mulf %380, %379 : vector<2x32xf32>
    %cst_113 = arith.constant 5.000000e-01 : f32
    %382 = vector.broadcast %cst_113 : f32 to vector<2x32xf32>
    %383 = arith.addf %381, %382 : vector<2x32xf32>
    %384 = arith.mulf %377, %360 : vector<2x32xf32>
    %385 = arith.mulf %372, %378 : vector<2x32xf32>
    %386 = arith.addf %384, %385 : vector<2x32xf32>
    %387 = math.tanh %386 : vector<2x32xf32>
    %388 = arith.mulf %383, %387 : vector<2x32xf32>
    %c0_114 = arith.constant 0 : index
    %c0_115 = arith.constant 0 : index
    %389 = vector.load %arg6[%c0_114, %c0_115] : memref<32x1xf32, #tpu.memory_space<vmem>>, vector<32x1xf32>
    %c0_116 = arith.constant 0 : index
    %c0_117 = arith.constant 0 : index
    %390 = vector.load %arg7[%c0_116, %c0_117] : memref<1x1xf32, #tpu.memory_space<vmem>>, vector<1x1xf32>
    %cst_118 = arith.constant dense<0.000000e+00> : vector<2x1xf32>
    %391 = tpu.matmul %388, %389, %cst_118 {dimension_numbers = #tpu.dot_dimension_numbers<[1], [0], [0], [1], [0, 0, 1, 1], [], []>} : vector<2x32xf32>, vector<32x1xf32>, vector<2x1xf32> -> vector<2x1xf32>
    %392 = vector.broadcast %390 : vector<1x1xf32> to vector<2x1xf32>
    %393 = arith.addf %391, %392 : vector<2x1xf32>
    %c0_119 = arith.constant 0 : index
    %c0_120 = arith.constant 0 : index
    %394 = vector.load %arg8[%c0_119, %c0_120] : memref<2x1xf32, #tpu.memory_space<vmem>>, vector<2x1xf32>
    tpu.vector_store %arg8[%c0_119, %c0_120], %393 {strides = array<i32>} : memref<2x1xf32, #tpu.memory_space<vmem>>, vector<2x1xf32>,
    return
  }
}

</mosaic_0001>

<llo_original>
// kernel: lstm_model_forward.1
$region0: #{lstm_model_forward.1}
  #allocation0 [shape = 'u32[]', space=smem, size = 0x4, offset = 0x4, fixed_abs, tag = 'smem constant byte address 0x4 - core index']
  #allocation1 [shape = 'u32[72,128]{1,0:T(1,128)}', space=vmem, size = 0x9000, scoped, tag = 'internal scratch']
  #allocation2 [shape = 'f32[1,1]{1,0:T(1,128)S(1)}', space=vmem, size = 0x200, scoped, tag = 'scoped memory for lstm_model_forward.1']
  %s0 = inlined_call_operand.vmem [shape: f32[2,7,4], index: 0, kind: input, shape index: {}]
  %s1 = inlined_call_operand.vmem [shape: f32[4,128], index: 1, kind: input, shape index: {}]
  %s2 = inlined_call_operand.vmem [shape: f32[32,128], index: 2, kind: input, shape index: {}]
  %s3 = inlined_call_operand.vmem [shape: f32[1,128], index: 3, kind: input, shape index: {}]
  %s4 = inlined_call_operand.hbm [shape: f32[64,128], index: 4, kind: input, shape index: {}]
  %s5 = inlined_call_operand.vmem [shape: f32[1,128], index: 5, kind: input, shape index: {}]
  %s6 = inlined_call_operand.vmem [shape: f32[32,1], index: 6, kind: input, shape index: {}]
  %s7 = inlined_call_operand.<no memory space> [shape: f32[1,1], index: 7, kind: input, shape index: {}]
  %s8 = inlined_call_operand.vmem [shape: f32[2,1], index: 8, kind: output, shape index: {}]
  %s9 = sld [smem:[#allocation0]]
  $region46: #{lstm_model_forward.1} parent=0
    _
  %s11 = ssub.s32 1, %s9
  %s12 = scalar_select 0, %s11, %s9
  %v13 = vstv %s7
  %14 = vst [vmem:[#allocation2] sm:$0x1] %v13
  $region1: #{lstm_model_forward.1} parent=0
    #allocation3 [shape = 'u8[32768]{0}', space=vmem, size = 0x8000, scoped, tag = 'input window, operand 4, single buffered']
    #allocation4 [shape = 's32[1]{0}', space=sflag, size = 0x4, scoped, tag = 'scoped memory for lstm_model_forward.1']
    %15 = vsyncpa [#allocation4], 0
    // Predicated region
    $region2: #{lstm_model_forward.1} parent=1 // pred_check
      _
    $region3: #{lstm_model_forward.1} parent=1 // pred_check_branch
      %17 = sbr.rel (0) target = $region5
    $region4: #{lstm_model_forward.1} parent=1 // pred_region
      _
    $region5: #{lstm_model_forward.1} parent=1 // pred_fallthru
      _
    // Predicated region
    $region6: #{lstm_model_forward.1} parent=1 // pred_check
      _
    $region7: #{lstm_model_forward.1} parent=1 // pred_check_branch
      %19 = sbr.rel (0) target = $region9
    $region8: #{lstm_model_forward.1} parent=1 // pred_region
      _
    $region9: #{lstm_model_forward.1} parent=1 // pred_fallthru
      _
    // Predicated region
    $region10: #{lstm_model_forward.1} parent=1 // pred_check
      _
    $region11: #{lstm_model_forward.1} parent=1 // pred_check_branch
      %21 = sbr.rel (0) target = $region13
    $region12: #{lstm_model_forward.1} parent=1 // pred_region
      _
    $region13: #{lstm_model_forward.1} parent=1 // pred_fallthru
      _
    // Predicated region
    $region14: #{lstm_model_forward.1} parent=1 // pred_check
      _
    $region15: #{lstm_model_forward.1} parent=1 // pred_check_branch
      %23 = sbr.rel (0) target = $region17
    $region16: #{lstm_model_forward.1} parent=1 // pred_region
      _
    $region17: #{lstm_model_forward.1} parent=1 // pred_fallthru
      _
    // Predicated region
    $region18: #{lstm_model_forward.1} parent=1 // pred_check
      _
    $region19: #{lstm_model_forward.1} parent=1 // pred_check_branch
      %25 = sbr.rel (0) target = $region21
    $region20: #{lstm_model_forward.1} parent=1 // pred_region
      %27 = vsyncadd [#allocation4], 0
      %s28 = sshll.u32 %s4, 4
      %s29 = int_to_ptr.hbm [resolvable:$true] %s28
      %s30 = sshll.u32 [#allocation3], 4
      %s31 = int_to_ptr.vmem [resolvable:$true] %s30
      %36 = dma.hbm_to_vmem [thread:$0]  %s29, 1024, %s31, [#allocation4], 128, 128, 8
    $region21: #{lstm_model_forward.1} parent=1 // pred_fallthru
      _
    // Predicated region
    $region22: #{lstm_model_forward.1} parent=1 // pred_check
      _
    $region23: #{lstm_model_forward.1} parent=1 // pred_check_branch
      %38 = sbr.rel (0) target = $region25
    $region24: #{lstm_model_forward.1} parent=1 // pred_region
      _
    $region25: #{lstm_model_forward.1} parent=1 // pred_fallthru
      _
    // Predicated region
    $region26: #{lstm_model_forward.1} parent=1 // pred_check
      _
    $region27: #{lstm_model_forward.1} parent=1 // pred_check_branch
      %40 = sbr.rel (0) target = $region29
    $region28: #{lstm_model_forward.1} parent=1 // pred_region
      _
    $region29: #{lstm_model_forward.1} parent=1 // pred_fallthru
      _
    // Predicated region
    $region30: #{lstm_model_forward.1} parent=1 // pred_check
      _
    $region31: #{lstm_model_forward.1} parent=1 // pred_check_branch
      %42 = sbr.rel (0) target = $region33
    $region32: #{lstm_model_forward.1} parent=1 // pred_region
      _
    $region33: #{lstm_model_forward.1} parent=1 // pred_fallthru
      _
    // Predicated region
    $region34: #{lstm_model_forward.1} parent=1 // pred_check
      _
    $region35: #{lstm_model_forward.1} parent=1 // pred_check_branch
      %44 = sbr.rel (0) target = $region37
    $region36: #{lstm_model_forward.1} parent=1 // pred_region
      %46 = dma.done [#allocation4], 1024
    $region37: #{lstm_model_forward.1} parent=1 // pred_fallthru
      _
    %v47 = vld [vmem:[%s1] sm:$0xf]
    %v48 = vld [vmem:[%s2] sm:$0xff]
    %v49 = vld [vmem:[%s2 + $0x8] sm:$0xff]
    %v50 = vld [vmem:[%s2 + $0x10] sm:$0xff]
    %v51 = vld [vmem:[%s2 + $0x18] sm:$0xff]
    %v52 = vld [vmem:[%s3] sm:$0x1]
    %v53 = vld [vmem:[%s0] sm:$0x7f]
    %v54 = vld [vmem:[%s0 + $0x8] sm:$0x7f]
    %v56 = vrot.slane %v54, 1
    %vm58 = vcmask 1046528
    %v59 = vsel %vm58, %v53, %v56
    %v61 = vperm.slane %v52, 0
    %vm63 = vcmask 31744
    %v65 = vsel %vm63, %v59, 0
    %v67 = vsel %vm63, %v56, 0
    %vm69 = vcmask 1043456
    %v71 = vsel %vm69, %v47, 0
    %73 = vmatpush.msra.mxu0 0.0
    %74 = vmatpush.msra.mxu0 0.0
    %75 = vmatpush.msra.mxu0 0.0
    %76 = vmatpush.msra.mxu0 0.0
    %77 = vmatpush.msra.mxu0 0.0
    %78 = vmatpush.msra.mxu0 0.0
    %79 = vmatpush.msra.mxu0 0.0
    %80 = vmatpush.msra.mxu0 0.0
    %81 = vmatpush.msra.mxu0 0.0
    %82 = vmatpush.msra.mxu0 0.0
    %83 = vmatpush.msra.mxu0 0.0
    %84 = vmatpush.msra.mxu0 0.0
    %85 = vmatpush.msra.mxu0 0.0
    %86 = vmatpush.msra.mxu0 0.0
    %87 = vmatpush.msra.mxu0 0.0
    %88 = vmatpush.msra.mxu0 %v71
    %89 = vmatmul.f32.gmra.mxu0 %v65
    %v90 = vpop.f32.mrf.mxu0
    %v91 = vadd.f32 %v61, %v90
    %92 = vmatmul.f32.gmra.mxu0 %v67
    %v93 = vpop.f32.mrf.mxu0
    %v94 = vadd.f32 %v61, %v93
    %95 = vdwg.mxu0
    %v97 = vrot.slane %v91, 6
    %vm99 = vcmask 1040384
    %v100 = vsel %vm99, %v91, %v97
    %vm101 = vcmask 261120
    %v103 = vsel %vm101, 0.0, 0
    %105 = vmatpush.msra.mxu0 0.0
    %106 = vmatpush.msra.mxu0 0.0
    %107 = vmatpush.msra.mxu0 0.0
    %108 = vmatpush.msra.mxu0 0.0
    %109 = vmatpush.msra.mxu0 0.0
    %110 = vmatpush.msra.mxu0 0.0
    %111 = vmatpush.msra.mxu0 0.0
    %112 = vmatpush.msra.mxu0 0.0
    %113 = vmatpush.msra.mxu0 0.0
    %114 = vmatpush.msra.mxu0 0.0
    %115 = vmatpush.msra.mxu0 0.0
    %116 = vmatpush.msra.mxu0 0.0
    %117 = vmatpush.msra.mxu0 %v51
    %118 = vmatpush.msra.mxu0 %v50
    %119 = vmatpush.msra.mxu0 %v49
    %120 = vmatpush.msra.mxu0 %v48
    %121 = vmatmul.f32.gmra.mxu0 %v103
    %v122 = vpop.f32.mrf.mxu0
    %v123 = vadd.f32 0.0, %v122
    %124 = vdwg.mxu0
    %v125 = vadd.f32 %v100, %v123
    %v126 = vtanh.pop %v125
    %v127 = vmul.f32 %v126, 0.5
    %v128 = vadd.f32 %v127, 0.5
    %v129 = vmul.f32 %v128, 0.0
    %131 = vrot.lane.b32.xlu0 %v126, 64
    %v132 = vpop.permute.xlu0 %131
    %v134 = vmul.f32 %v128, %v132
    %136 = vrot.lane.b32.xlu0 %v134, 32
    %v137 = vpop.permute.xlu0 %136
    %v139 = vadd.f32 %v129, %v137
    %v140 = vtanh.pop %v139
    %142 = vrot.lane.b32.xlu0 %v140, 64
    %v143 = vpop.permute.xlu0 %142
    %v145 = vmul.f32 %v128, %v143
    %v146 = vrot.slane %v91, 1
    %v149 = vrot.slane %v94, 7
    %v151 = vsel %vm99, %v146, %v149
    %153 = vrot.lane.b32.xlu0 %v145, 32
    %v154 = vpop.permute.xlu0 %153
    %v155 = vsel %vm101, %v154, 0
    %157 = vmatpush.msra.mxu0 0.0
    %158 = vmatpush.msra.mxu0 0.0
    %159 = vmatpush.msra.mxu0 0.0
    %160 = vmatpush.msra.mxu0 0.0
    %161 = vmatpush.msra.mxu0 0.0
    %162 = vmatpush.msra.mxu0 0.0
    %163 = vmatpush.msra.mxu0 0.0
    %164 = vmatpush.msra.mxu0 0.0
    %165 = vmatpush.msra.mxu0 0.0
    %166 = vmatpush.msra.mxu0 0.0
    %167 = vmatpush.msra.mxu0 0.0
    %168 = vmatpush.msra.mxu0 0.0
    %169 = vmatpush.msra.mxu0 %v51
    %170 = vmatpush.msra.mxu0 %v50
    %171 = vmatpush.msra.mxu0 %v49
    %172 = vmatpush.msra.mxu0 %v48
    %173 = vmatmul.f32.gmra.mxu0 %v155
    %v174 = vpop.f32.mrf.mxu0
    %v175 = vadd.f32 0.0, %v174
    %176 = vdwg.mxu0
    %v177 = vadd.f32 %v151, %v175
    %v178 = vtanh.pop %v177
    %v179 = vmul.f32 %v178, 0.5
    %v180 = vadd.f32 %v179, 0.5
    %v181 = vmul.f32 %v180, %v139
    %183 = vrot.lane.b32.xlu0 %v178, 64
    %v184 = vpop.permute.xlu0 %183
    %v186 = vmul.f32 %v180, %v184
    %188 = vrot.lane.b32.xlu0 %v186, 32
    %v189 = vpop.permute.xlu0 %188
    %v191 = vadd.f32 %v181, %v189
    %v192 = vtanh.pop %v191
    %194 = vrot.lane.b32.xlu0 %v192, 64
    %v195 = vpop.permute.xlu0 %194
    %v197 = vmul.f32 %v180, %v195
    %v198 = vrot.slane %v91, 2
    %v200 = vsel %vm99, %v198, %v94
    %202 = vrot.lane.b32.xlu0 %v197, 32
    %v203 = vpop.permute.xlu0 %202
    %v204 = vsel %vm101, %v203, 0
    %206 = vmatpush.msra.mxu0 0.0
    %207 = vmatpush.msra.mxu0 0.0
    %208 = vmatpush.msra.mxu0 0.0
    %209 = vmatpush.msra.mxu0 0.0
    %210 = vmatpush.msra.mxu0 0.0
    %211 = vmatpush.msra.mxu0 0.0
    %212 = vmatpush.msra.mxu0 0.0
    %213 = vmatpush.msra.mxu0 0.0
    %214 = vmatpush.msra.mxu0 0.0
    %215 = vmatpush.msra.mxu0 0.0
    %216 = vmatpush.msra.mxu0 0.0
    %217 = vmatpush.msra.mxu0 0.0
    %218 = vmatpush.msra.mxu0 %v51
    %219 = vmatpush.msra.mxu0 %v50
    %220 = vmatpush.msra.mxu0 %v49
    %221 = vmatpush.msra.mxu0 %v48
    %222 = vmatmul.f32.gmra.mxu0 %v204
    %v223 = vpop.f32.mrf.mxu0
    %v224 = vadd.f32 0.0, %v223
    %225 = vdwg.mxu0
    %v226 = vadd.f32 %v200, %v224
    %v227 = vtanh.pop %v226
    %v228 = vmul.f32 %v227, 0.5
    %v229 = vadd.f32 %v228, 0.5
    %v230 = vmul.f32 %v229, %v191
    %232 = vrot.lane.b32.xlu0 %v227, 64
    %v233 = vpop.permute.xlu0 %232
    %v235 = vmul.f32 %v229, %v233
    %237 = vrot.lane.b32.xlu0 %v235, 32
    %v238 = vpop.permute.xlu0 %237
    %v240 = vadd.f32 %v230, %v238
    %v241 = vtanh.pop %v240
    %243 = vrot.lane.b32.xlu0 %v241, 64
    %v244 = vpop.permute.xlu0 %243
    %v246 = vmul.f32 %v229, %v244
    %v247 = vrot.slane %v91, 3
    %v249 = vrot.slane %v94, 1
    %v251 = vsel %vm99, %v247, %v249
    %253 = vrot.lane.b32.xlu0 %v246, 32
    %v254 = vpop.permute.xlu0 %253
    %v255 = vsel %vm101, %v254, 0
    %257 = vmatpush.msra.mxu0 0.0
    %258 = vmatpush.msra.mxu0 0.0
    %259 = vmatpush.msra.mxu0 0.0
    %260 = vmatpush.msra.mxu0 0.0
    %261 = vmatpush.msra.mxu0 0.0
    %262 = vmatpush.msra.mxu0 0.0
    %263 = vmatpush.msra.mxu0 0.0
    %264 = vmatpush.msra.mxu0 0.0
    %265 = vmatpush.msra.mxu0 0.0
    %266 = vmatpush.msra.mxu0 0.0
    %267 = vmatpush.msra.mxu0 0.0
    %268 = vmatpush.msra.mxu0 0.0
    %269 = vmatpush.msra.mxu0 %v51
    %270 = vmatpush.msra.mxu0 %v50
    %271 = vmatpush.msra.mxu0 %v49
    %272 = vmatpush.msra.mxu0 %v48
    %273 = vmatmul.f32.gmra.mxu0 %v255
    %v274 = vpop.f32.mrf.mxu0
    %v275 = vadd.f32 0.0, %v274
    %276 = vdwg.mxu0
    %v277 = vadd.f32 %v251, %v275
    %v278 = vtanh.pop %v277
    %v279 = vmul.f32 %v278, 0.5
    %v280 = vadd.f32 %v279, 0.5
    %v281 = vmul.f32 %v280, %v240
    %283 = vrot.lane.b32.xlu0 %v278, 64
    %v284 = vpop.permute.xlu0 %283
    %v286 = vmul.f32 %v280, %v284
    %288 = vrot.lane.b32.xlu0 %v286, 32
    %v289 = vpop.permute.xlu0 %288
    %v291 = vadd.f32 %v281, %v289
    %v292 = vtanh.pop %v291
    %294 = vrot.lane.b32.xlu0 %v292, 64
    %v295 = vpop.permute.xlu0 %294
    %v297 = vmul.f32 %v280, %v295
    %v298 = vrot.slane %v91, 4
    %v300 = vrot.slane %v94, 2
    %v302 = vsel %vm99, %v298, %v300
    %304 = vrot.lane.b32.xlu0 %v297, 32
    %v305 = vpop.permute.xlu0 %304
    %v306 = vsel %vm101, %v305, 0
    %308 = vmatpush.msra.mxu0 0.0
    %309 = vmatpush.msra.mxu0 0.0
    %310 = vmatpush.msra.mxu0 0.0
    %311 = vmatpush.msra.mxu0 0.0
    %312 = vmatpush.msra.mxu0 0.0
    %313 = vmatpush.msra.mxu0 0.0
    %314 = vmatpush.msra.mxu0 0.0
    %315 = vmatpush.msra.mxu0 0.0
    %316 = vmatpush.msra.mxu0 0.0
    %317 = vmatpush.msra.mxu0 0.0
    %318 = vmatpush.msra.mxu0 0.0
    %319 = vmatpush.msra.mxu0 0.0
    %320 = vmatpush.msra.mxu0 %v51
    %321 = vmatpush.msra.mxu0 %v50
    %322 = vmatpush.msra.mxu0 %v49
    %323 = vmatpush.msra.mxu0 %v48
    %324 = vmatmul.f32.gmra.mxu0 %v306
    %v325 = vpop.f32.mrf.mxu0
    %v326 = vadd.f32 0.0, %v325
    %327 = vdwg.mxu0
    %v328 = vadd.f32 %v302, %v326
    %v329 = vtanh.pop %v328
    %v330 = vmul.f32 %v329, 0.5
    %v331 = vadd.f32 %v330, 0.5
    %v332 = vmul.f32 %v331, %v291
    %334 = vrot.lane.b32.xlu0 %v329, 64
    %v335 = vpop.permute.xlu0 %334
    %v337 = vmul.f32 %v331, %v335
    %339 = vrot.lane.b32.xlu0 %v337, 32
    %v340 = vpop.permute.xlu0 %339
    %v342 = vadd.f32 %v332, %v340
    %v343 = vtanh.pop %v342
    %345 = vrot.lane.b32.xlu0 %v343, 64
    %v346 = vpop.permute.xlu0 %345
    %v348 = vmul.f32 %v331, %v346
    %v349 = vrot.slane %v91, 5
    %v351 = vrot.slane %v94, 3
    %v353 = vsel %vm99, %v349, %v351
    %355 = vrot.lane.b32.xlu0 %v348, 32
    %v356 = vpop.permute.xlu0 %355
    %v357 = vsel %vm101, %v356, 0
    %359 = vmatpush.msra.mxu0 0.0
    %360 = vmatpush.msra.mxu0 0.0
    %361 = vmatpush.msra.mxu0 0.0
    %362 = vmatpush.msra.mxu0 0.0
    %363 = vmatpush.msra.mxu0 0.0
    %364 = vmatpush.msra.mxu0 0.0
    %365 = vmatpush.msra.mxu0 0.0
    %366 = vmatpush.msra.mxu0 0.0
    %367 = vmatpush.msra.mxu0 0.0
    %368 = vmatpush.msra.mxu0 0.0
    %369 = vmatpush.msra.mxu0 0.0
    %370 = vmatpush.msra.mxu0 0.0
    %371 = vmatpush.msra.mxu0 %v51
    %372 = vmatpush.msra.mxu0 %v50
    %373 = vmatpush.msra.mxu0 %v49
    %374 = vmatpush.msra.mxu0 %v48
    %375 = vmatmul.f32.gmra.mxu0 %v357
    %v376 = vpop.f32.mrf.mxu0
    %v377 = vadd.f32 0.0, %v376
    %378 = vdwg.mxu0
    %v379 = vadd.f32 %v353, %v377
    %v380 = vtanh.pop %v379
    %v381 = vmul.f32 %v380, 0.5
    %v382 = vadd.f32 %v381, 0.5
    %v383 = vmul.f32 %v382, %v342
    %385 = vrot.lane.b32.xlu0 %v380, 64
    %v386 = vpop.permute.xlu0 %385
    %v388 = vmul.f32 %v382, %v386
    %390 = vrot.lane.b32.xlu0 %v388, 32
    %v391 = vpop.permute.xlu0 %390
    %v393 = vadd.f32 %v383, %v391
    %v394 = vtanh.pop %v393
    %396 = vrot.lane.b32.xlu0 %v394, 64
    %v397 = vpop.permute.xlu0 %396
    %v399 = vmul.f32 %v382, %v397
    %v400 = vrot.slane %v94, 4
    %v402 = vsel %vm99, %v97, %v400
    %404 = vrot.lane.b32.xlu0 %v399, 32
    %v405 = vpop.permute.xlu0 %404
    %v406 = vsel %vm101, %v405, 0
    %408 = vmatpush.msra.mxu0 0.0
    %409 = vmatpush.msra.mxu0 0.0
    %410 = vmatpush.msra.mxu0 0.0
    %411 = vmatpush.msra.mxu0 0.0
    %412 = vmatpush.msra.mxu0 0.0
    %413 = vmatpush.msra.mxu0 0.0
    %414 = vmatpush.msra.mxu0 0.0
    %415 = vmatpush.msra.mxu0 0.0
    %416 = vmatpush.msra.mxu0 0.0
    %417 = vmatpush.msra.mxu0 0.0
    %418 = vmatpush.msra.mxu0 0.0
    %419 = vmatpush.msra.mxu0 0.0
    %420 = vmatpush.msra.mxu0 %v51
    %421 = vmatpush.msra.mxu0 %v50
    %422 = vmatpush.msra.mxu0 %v49
    %423 = vmatpush.msra.mxu0 %v48
    %424 = vmatmul.f32.gmra.mxu0 %v406
    %v425 = vpop.f32.mrf.mxu0
    %v426 = vadd.f32 0.0, %v425
    %427 = vdwg.mxu0
    %v428 = vadd.f32 %v402, %v426
    %v429 = vtanh.pop %v428
    %v430 = vmul.f32 %v429, 0.5
    %v431 = vadd.f32 %v430, 0.5
    %v432 = vmul.f32 %v431, %v393
    %434 = vrot.lane.b32.xlu0 %v429, 64
    %v435 = vpop.permute.xlu0 %434
    %v437 = vmul.f32 %v431, %v435
    %439 = vrot.lane.b32.xlu0 %v437, 32
    %v440 = vpop.permute.xlu0 %439
    %v442 = vadd.f32 %v432, %v440
    %v443 = vtanh.pop %v442
    %445 = vrot.lane.b32.xlu0 %v443, 64
    %v446 = vpop.permute.xlu0 %445
    %v448 = vmul.f32 %v431, %v446
    %v449 = vld [vmem:[#allocation3] sm:$0xff]
    %v450 = vld [vmem:[#allocation3 + $0x8] sm:$0xff]
    %v451 = vld [vmem:[#allocation3 + $0x10] sm:$0xff]
    %v452 = vld [vmem:[#allocation3 + $0x18] sm:$0xff]
    %v453 = vld [vmem:[#allocation3 + $0x20] sm:$0xff]
    %v454 = vld [vmem:[#allocation3 + $0x28] sm:$0xff]
    %v455 = vld [vmem:[#allocation3 + $0x30] sm:$0xff]
    %v456 = vld [vmem:[#allocation3 + $0x38] sm:$0xff]
    %v457 = vld [vmem:[%s5] sm:$0x1]
    %v459 = vsel %vm101, %v154, 0.0
    %v461 = vperm.slane %v457, 0
    %vm463 = vcmask 523264
    %v465 = vsel %vm463, %v459, 0
    %467 = vmatpush.msra.mxu0 0.0
    %468 = vmatpush.msra.mxu0 0.0
    %469 = vmatpush.msra.mxu0 0.0
    %470 = vmatpush.msra.mxu0 0.0
    %471 = vmatpush.msra.mxu0 0.0
    %472 = vmatpush.msra.mxu0 0.0
    %473 = vmatpush.msra.mxu0 0.0
    %474 = vmatpush.msra.mxu0 0.0
    %475 = vmatpush.msra.mxu0 %v456
    %476 = vmatpush.msra.mxu0 %v455
    %477 = vmatpush.msra.mxu0 %v454
    %478 = vmatpush.msra.mxu0 %v453
    %479 = vmatpush.msra.mxu0 %v452
    %480 = vmatpush.msra.mxu0 %v451
    %481 = vmatpush.msra.mxu0 %v450
    %482 = vmatpush.msra.mxu0 %v449
    %483 = vmatmul.f32.gmra.mxu0 %v465
    %v484 = vpop.f32.mrf.mxu0
    %v485 = vadd.f32 %v461, %v484
    %486 = vdwg.mxu0
    %v487 = vtanh.pop %v485
    %v488 = vmul.f32 %v487, 0.5
    %v489 = vadd.f32 %v488, 0.5
    %v490 = vmul.f32 %v489, 0.0
    %492 = vrot.lane.b32.xlu0 %v487, 64
    %v493 = vpop.permute.xlu0 %492
    %v495 = vmul.f32 %v489, %v493
    %497 = vrot.lane.b32.xlu0 %v495, 32
    %v498 = vpop.permute.xlu0 %497
    %v500 = vadd.f32 %v490, %v498
    %v501 = vtanh.pop %v500
    %503 = vrot.lane.b32.xlu0 %v501, 64
    %v504 = vpop.permute.xlu0 %503
    %v506 = vmul.f32 %v489, %v504
    %509 = vrot.lane.b32.xlu0 %v506, 64
    %v510 = vpop.permute.xlu0 %509
    %v512 = vsel %vm101, %v203, %v510
    %v514 = vsel %vm463, %v512, 0
    %516 = vmatpush.msra.mxu0 0.0
    %517 = vmatpush.msra.mxu0 0.0
    %518 = vmatpush.msra.mxu0 0.0
    %519 = vmatpush.msra.mxu0 0.0
    %520 = vmatpush.msra.mxu0 0.0
    %521 = vmatpush.msra.mxu0 0.0
    %522 = vmatpush.msra.mxu0 0.0
    %523 = vmatpush.msra.mxu0 0.0
    %524 = vmatpush.msra.mxu0 %v456
    %525 = vmatpush.msra.mxu0 %v455
    %526 = vmatpush.msra.mxu0 %v454
    %527 = vmatpush.msra.mxu0 %v453
    %528 = vmatpush.msra.mxu0 %v452
    %529 = vmatpush.msra.mxu0 %v451
    %530 = vmatpush.msra.mxu0 %v450
    %531 = vmatpush.msra.mxu0 %v449
    %532 = vmatmul.f32.gmra.mxu0 %v514
    %v533 = vpop.f32.mrf.mxu0
    %v534 = vadd.f32 %v461, %v533
    %535 = vdwg.mxu0
    %v536 = vtanh.pop %v534
    %v537 = vmul.f32 %v536, 0.5
    %v538 = vadd.f32 %v537, 0.5
    %v539 = vmul.f32 %v538, %v500
    %541 = vrot.lane.b32.xlu0 %v536, 64
    %v542 = vpop.permute.xlu0 %541
    %v544 = vmul.f32 %v538, %v542
    %546 = vrot.lane.b32.xlu0 %v544, 32
    %v547 = vpop.permute.xlu0 %546
    %v549 = vadd.f32 %v539, %v547
    %v550 = vtanh.pop %v549
    %552 = vrot.lane.b32.xlu0 %v550, 64
    %v553 = vpop.permute.xlu0 %552
    %v555 = vmul.f32 %v538, %v553
    %558 = vrot.lane.b32.xlu0 %v555, 64
    %v559 = vpop.permute.xlu0 %558
    %v561 = vsel %vm101, %v254, %v559
    %v563 = vsel %vm463, %v561, 0
    %565 = vmatpush.msra.mxu0 0.0
    %566 = vmatpush.msra.mxu0 0.0
    %567 = vmatpush.msra.mxu0 0.0
    %568 = vmatpush.msra.mxu0 0.0
    %569 = vmatpush.msra.mxu0 0.0
    %570 = vmatpush.msra.mxu0 0.0
    %571 = vmatpush.msra.mxu0 0.0
    %572 = vmatpush.msra.mxu0 0.0
    %573 = vmatpush.msra.mxu0 %v456
    %574 = vmatpush.msra.mxu0 %v455
    %575 = vmatpush.msra.mxu0 %v454
    %576 = vmatpush.msra.mxu0 %v453
    %577 = vmatpush.msra.mxu0 %v452
    %578 = vmatpush.msra.mxu0 %v451
    %579 = vmatpush.msra.mxu0 %v450
    %580 = vmatpush.msra.mxu0 %v449
    %581 = vmatmul.f32.gmra.mxu0 %v563
    %v582 = vpop.f32.mrf.mxu0
    %v583 = vadd.f32 %v461, %v582
    %584 = vdwg.mxu0
    %v585 = vtanh.pop %v583
    %v586 = vmul.f32 %v585, 0.5
    %v587 = vadd.f32 %v586, 0.5
    %v588 = vmul.f32 %v587, %v549
    %590 = vrot.lane.b32.xlu0 %v585, 64
    %v591 = vpop.permute.xlu0 %590
    %v593 = vmul.f32 %v587, %v591
    %595 = vrot.lane.b32.xlu0 %v593, 32
    %v596 = vpop.permute.xlu0 %595
    %v598 = vadd.f32 %v588, %v596
    %v599 = vtanh.pop %v598
    %601 = vrot.lane.b32.xlu0 %v599, 64
    %v602 = vpop.permute.xlu0 %601
    %v604 = vmul.f32 %v587, %v602
    %607 = vrot.lane.b32.xlu0 %v604, 64
    %v608 = vpop.permute.xlu0 %607
    %v610 = vsel %vm101, %v305, %v608
    %v612 = vsel %vm463, %v610, 0
    %614 = vmatpush.msra.mxu0 0.0
    %615 = vmatpush.msra.mxu0 0.0
    %616 = vmatpush.msra.mxu0 0.0
    %617 = vmatpush.msra.mxu0 0.0
    %618 = vmatpush.msra.mxu0 0.0
    %619 = vmatpush.msra.mxu0 0.0
    %620 = vmatpush.msra.mxu0 0.0
    %621 = vmatpush.msra.mxu0 0.0
    %622 = vmatpush.msra.mxu0 %v456
    %623 = vmatpush.msra.mxu0 %v455
    %624 = vmatpush.msra.mxu0 %v454
    %625 = vmatpush.msra.mxu0 %v453
    %626 = vmatpush.msra.mxu0 %v452
    %627 = vmatpush.msra.mxu0 %v451
    %628 = vmatpush.msra.mxu0 %v450
    %629 = vmatpush.msra.mxu0 %v449
    %630 = vmatmul.f32.gmra.mxu0 %v612
    %v631 = vpop.f32.mrf.mxu0
    %v632 = vadd.f32 %v461, %v631
    %633 = vdwg.mxu0
    %v634 = vtanh.pop %v632
    %v635 = vmul.f32 %v634, 0.5
    %v636 = vadd.f32 %v635, 0.5
    %v637 = vmul.f32 %v636, %v598
    %639 = vrot.lane.b32.xlu0 %v634, 64
    %v640 = vpop.permute.xlu0 %639
    %v642 = vmul.f32 %v636, %v640
    %644 = vrot.lane.b32.xlu0 %v642, 32
    %v645 = vpop.permute.xlu0 %644
    %v647 = vadd.f32 %v637, %v645
    %v648 = vtanh.pop %v647
    %650 = vrot.lane.b32.xlu0 %v648, 64
    %v651 = vpop.permute.xlu0 %650
    %v653 = vmul.f32 %v636, %v651
    %656 = vrot.lane.b32.xlu0 %v653, 64
    %v657 = vpop.permute.xlu0 %656
    %v659 = vsel %vm101, %v356, %v657
    %v661 = vsel %vm463, %v659, 0
    %663 = vmatpush.msra.mxu0 0.0
    %664 = vmatpush.msra.mxu0 0.0
    %665 = vmatpush.msra.mxu0 0.0
    %666 = vmatpush.msra.mxu0 0.0
    %667 = vmatpush.msra.mxu0 0.0
    %668 = vmatpush.msra.mxu0 0.0
    %669 = vmatpush.msra.mxu0 0.0
    %670 = vmatpush.msra.mxu0 0.0
    %671 = vmatpush.msra.mxu0 %v456
    %672 = vmatpush.msra.mxu0 %v455
    %673 = vmatpush.msra.mxu0 %v454
    %674 = vmatpush.msra.mxu0 %v453
    %675 = vmatpush.msra.mxu0 %v452
    %676 = vmatpush.msra.mxu0 %v451
    %677 = vmatpush.msra.mxu0 %v450
    %678 = vmatpush.msra.mxu0 %v449
    %679 = vmatmul.f32.gmra.mxu0 %v661
    %v680 = vpop.f32.mrf.mxu0
    %v681 = vadd.f32 %v461, %v680
    %682 = vdwg.mxu0
    %v683 = vtanh.pop %v681
    %v684 = vmul.f32 %v683, 0.5
    %v685 = vadd.f32 %v684, 0.5
    %v686 = vmul.f32 %v685, %v647
    %688 = vrot.lane.b32.xlu0 %v683, 64
    %v689 = vpop.permute.xlu0 %688
    %v691 = vmul.f32 %v685, %v689
    %693 = vrot.lane.b32.xlu0 %v691, 32
    %v694 = vpop.permute.xlu0 %693
    %v696 = vadd.f32 %v686, %v694
    %v697 = vtanh.pop %v696
    %699 = vrot.lane.b32.xlu0 %v697, 64
    %v700 = vpop.permute.xlu0 %699
    %v702 = vmul.f32 %v685, %v700
    %705 = vrot.lane.b32.xlu0 %v702, 64
    %v706 = vpop.permute.xlu0 %705
    %v708 = vsel %vm101, %v405, %v706
    %v710 = vsel %vm463, %v708, 0
    %712 = vmatpush.msra.mxu0 0.0
    %713 = vmatpush.msra.mxu0 0.0
    %714 = vmatpush.msra.mxu0 0.0
    %715 = vmatpush.msra.mxu0 0.0
    %716 = vmatpush.msra.mxu0 0.0
    %717 = vmatpush.msra.mxu0 0.0
    %718 = vmatpush.msra.mxu0 0.0
    %719 = vmatpush.msra.mxu0 0.0
    %720 = vmatpush.msra.mxu0 %v456
    %721 = vmatpush.msra.mxu0 %v455
    %722 = vmatpush.msra.mxu0 %v454
    %723 = vmatpush.msra.mxu0 %v453
    %724 = vmatpush.msra.mxu0 %v452
    %725 = vmatpush.msra.mxu0 %v451
    %726 = vmatpush.msra.mxu0 %v450
    %727 = vmatpush.msra.mxu0 %v449
    %728 = vmatmul.f32.gmra.mxu0 %v710
    %v729 = vpop.f32.mrf.mxu0
    %v730 = vadd.f32 %v461, %v729
    %731 = vdwg.mxu0
    %v732 = vtanh.pop %v730
    %v733 = vmul.f32 %v732, 0.5
    %v734 = vadd.f32 %v733, 0.5
    %v735 = vmul.f32 %v734, %v696
    %737 = vrot.lane.b32.xlu0 %v732, 64
    %v738 = vpop.permute.xlu0 %737
    %v740 = vmul.f32 %v734, %v738
    %742 = vrot.lane.b32.xlu0 %v740, 32
    %v743 = vpop.permute.xlu0 %742
    %v745 = vadd.f32 %v735, %v743
    %v746 = vtanh.pop %v745
    %748 = vrot.lane.b32.xlu0 %v746, 64
    %v749 = vpop.permute.xlu0 %748
    %v751 = vmul.f32 %v734, %v749
    %753 = vrot.lane.b32.xlu0 %v448, 32
    %v754 = vpop.permute.xlu0 %753
    %757 = vrot.lane.b32.xlu0 %v751, 64
    %v758 = vpop.permute.xlu0 %757
    %v760 = vsel %vm101, %v754, %v758
    %v762 = vsel %vm463, %v760, 0
    %764 = vmatpush.msra.mxu0 0.0
    %765 = vmatpush.msra.mxu0 0.0
    %766 = vmatpush.msra.mxu0 0.0
    %767 = vmatpush.msra.mxu0 0.0
    %768 = vmatpush.msra.mxu0 0.0
    %769 = vmatpush.msra.mxu0 0.0
    %770 = vmatpush.msra.mxu0 0.0
    %771 = vmatpush.msra.mxu0 0.0
    %772 = vmatpush.msra.mxu0 %v456
    %773 = vmatpush.msra.mxu0 %v455
    %774 = vmatpush.msra.mxu0 %v454
    %775 = vmatpush.msra.mxu0 %v453
    %776 = vmatpush.msra.mxu0 %v452
    %777 = vmatpush.msra.mxu0 %v451
    %778 = vmatpush.msra.mxu0 %v450
    %779 = vmatpush.msra.mxu0 %v449
    %780 = vmatmul.f32.gmra.mxu0 %v762
    %v781 = vpop.f32.mrf.mxu0
    %v782 = vadd.f32 %v461, %v781
    %783 = vdwg.mxu0
    %v784 = vtanh.pop %v782
    %v785 = vmul.f32 %v784, 0.5
    %v786 = vadd.f32 %v785, 0.5
    %v787 = vmul.f32 %v786, %v745
    %789 = vrot.lane.b32.xlu0 %v784, 64
    %v790 = vpop.permute.xlu0 %789
    %v792 = vmul.f32 %v786, %v790
    %794 = vrot.lane.b32.xlu0 %v792, 32
    %v795 = vpop.permute.xlu0 %794
    %v797 = vadd.f32 %v787, %v795
    %v798 = vtanh.pop %v797
    %800 = vrot.lane.b32.xlu0 %v798, 64
    %v801 = vpop.permute.xlu0 %800
    %v803 = vmul.f32 %v786, %v801
    %v804 = vld [vmem:[%s6] sm:$0xff]
    %v805 = vld [vmem:[%s6 + $0x8] sm:$0xff]
    %v806 = vld [vmem:[%s6 + $0x10] sm:$0xff]
    %v807 = vld [vmem:[%s6 + $0x18] sm:$0xff]
    %v808 = vld [vmem:[#allocation2] sm:$0x1]
    %v810 = vperm.slane %v808, 0
    %813 = vrot.lane.b32.xlu0 %v803, 32
    %v814 = vpop.permute.xlu0 %813
    %v815 = vsel %vm101, %v814, 0
    %817 = vmatpush.msra.mxu0 0.0
    %818 = vmatpush.msra.mxu0 0.0
    %819 = vmatpush.msra.mxu0 0.0
    %820 = vmatpush.msra.mxu0 0.0
    %821 = vmatpush.msra.mxu0 0.0
    %822 = vmatpush.msra.mxu0 0.0
    %823 = vmatpush.msra.mxu0 0.0
    %824 = vmatpush.msra.mxu0 0.0
    %825 = vmatpush.msra.mxu0 0.0
    %826 = vmatpush.msra.mxu0 0.0
    %827 = vmatpush.msra.mxu0 0.0
    %828 = vmatpush.msra.mxu0 0.0
    %829 = vmatpush.msra.mxu0 %v807
    %830 = vmatpush.msra.mxu0 %v806
    %831 = vmatpush.msra.mxu0 %v805
    %832 = vmatpush.msra.mxu0 %v804
    %833 = vmatmul.f32.gmra.mxu0 %v815
    %v834 = vpop.f32.mrf.mxu0
    %v835 = vadd.f32 %v810, %v834
    %836 = vdwg.mxu0
    %vm837 = vcmask 1024
    %838 = vst.msk [vmem:[%s8] sm:$0x3] %vm837, %v835
    // Predicated region
    $region38: #{lstm_model_forward.1} parent=1 // pred_check
      _
    $region39: #{lstm_model_forward.1} parent=1 // pred_check_branch
      %840 = sbr.rel (0) target = $region41
    $region40: #{lstm_model_forward.1} parent=1 // pred_region
      _
    $region41: #{lstm_model_forward.1} parent=1 // pred_fallthru
      _
    // Predicated region
    $region42: #{lstm_model_forward.1} parent=1 // pred_check
      _
    $region43: #{lstm_model_forward.1} parent=1 // pred_check_branch
      %842 = sbr.rel (0) target = $region45
    $region44: #{lstm_model_forward.1} parent=1 // pred_region
      _
    $region45: #{lstm_model_forward.1} parent=1 // pred_fallthru
      _
    %843 = vsyncpa [#allocation4], 1

</llo_original>
